<compile_context>
chip_gen: v7x
topology: tpu7x:2x2x1
jax: 0.10.0
libtpu: 0.0.40
codegen_flags: <defaults>
</compile_context>

<pallas_src>
import jax
import jax.numpy as jnp
from jax.experimental import pallas as pl
from jax.experimental.pallas import tpu as pltpu

FL = 30      # temporal filter length (shape[2] of FilterBlock)
KS = 3       # spatial kernel size (azimuth x elevation)
C_OUT = 2    # c_fan * c_in = 2 * 1
LANE = 128   # lane width of one column block of S_all


def _round_up(x, m):
    return (x + m - 1) // m * m


def _simple_model_kernel(w_ref, s_ref, x_ref, out_ref):
    """w_ref:  (2T, Tp_pad)        bf16  both channels' transposed Toeplitz filters
       s_ref:  (P_pad, 4*LANE)     bf16  [ch1 base*(amp/P2) | ch1 shift | ch2 base*(amp/P2) | ch2 shift]
       x_ref:  (B, Tp_pad, P_pad)  bf16  B batch elements; time on sublanes,
                                         flattened padded spatial grid on lanes
       out_ref:(B, T)              f32   motion signal per batch element"""
    B = x_ref.shape[0]
    T = out_ref.shape[1]

    w = w_ref[...]          # resident weights, load once per grid step
    s = s_ref[...]

    for b in range(B):      # short static unroll over the batch tile
        x = x_ref[b]                                                   # (Tp_pad, P_pad)

        # stage 1: causal depthwise temporal conv, both channels in ONE matmul
        g = jnp.dot(w, x, preferred_element_type=jnp.float32)          # (2T, P_pad)

        # stage 2: 3x3 spatial conv; azimuth shift + mean/amplification are
        # pre-folded into s, so the result is already opponent-stage-aligned.
        f = jnp.dot(g.astype(jnp.bfloat16), s,
                    preferred_element_type=jnp.float32)                # (2T, 4*LANE)

        f1b = f[0:T,             0:LANE]       # ch1, azimuth 0..A-2, scaled amp/P2
        f1s = f[0:T,     LANE:2 * LANE]        # ch1, azimuth 1..A-1
        f2b = f[T:2 * T, 2 * LANE:3 * LANE]    # ch2, azimuth 0..A-2, scaled amp/P2
        f2s = f[T:2 * T, 3 * LANE:4 * LANE]    # ch2, azimuth 1..A-1

        # opponent correlation; padding lanes are exactly zero (zero S columns)
        rd = f1s * f2b - f2s * f1b                                     # (T, LANE)
        out_ref[b, :] = jnp.sum(rd, axis=1)                            # (T,)


def simple_model_forward(x, w_spatial, w_temporal, amp):
    """x: (N, 1, A, E, T) float32 — same axis convention as the PyTorch module."""
    N, C, A, E, T = x.shape
    assert C == 1
    Tp = T + FL - 1
    Tp_pad = _round_up(Tp, 16)             # bf16 sublane packing -> multiple of 16
    P = (A + 2) * (E + 2)
    P_pad = _round_up(P, LANE)             # lane dim of x / K dim of stage 2
    AE = A * E
    P2 = (A - 1) * E                       # number of opponent sites
    assert 1 <= P2 <= LANE and AE <= P_pad, (
        "azimuth/elevation grid too large for the single-lane-group layout; "
        "tile the azimuth axis (with a one-row halo) for bigger grids")

    # Batch tile: amortize per-grid-step overhead, but keep >=2 grid steps so the
    # 'parallel' axis still shards across both TensorCores on v7x.
    B_TILE = 1
    for cand in (32, 16, 8, 4, 2):
        if N % cand == 0 and N // cand >= 2:
            B_TILE = cand
            break

    # ---- wrapper-side glue (layout plumbing, built once per call) ----
    # causal temporal left-pad FL-1 (the reference's right pad is trimmed by
    # [..., :T]), azimuth/elevation +-1 zero pad, then time-major so the flattened
    # padded spatial grid lands on the lane axis.  Stored bf16 (halves the only
    # recurring HBM stream; MXU DEFAULT precision is a single bf16 pass anyway).
    xp = jnp.pad(x[:, 0].astype(jnp.float32), ((0, 0), (1, 1), (1, 1), (FL - 1, 0)))
    xt = xp.reshape(N, P, Tp).transpose(0, 2, 1)                      # (N, Tp, P)
    xt = jnp.pad(xt, ((0, 0), (0, Tp_pad - Tp), (0, P_pad - P)))
    xt = xt.astype(jnp.bfloat16)                                      # (N, Tp_pad, P_pad)

    # Transposed Toeplitz of the depthwise temporal filters, both channels stacked
    # along the rows: W_cat[c*T + t, i] = w_temporal[c, i - t].
    t_idx = jnp.arange(T)[:, None]
    i_idx = jnp.arange(Tp_pad)[None, :]
    k = i_idx - t_idx
    valid = (k >= 0) & (k < FL) & (i_idx < Tp)
    W = jnp.where(valid[None],
                  w_temporal.astype(jnp.float32)[:, jnp.clip(k, 0, FL - 1)],
                  0.0)                                                # (2, T, Tp_pad)
    W_cat = W.reshape(C_OUT * T, Tp_pad).astype(jnp.bfloat16)         # (2T, Tp_pad)

    # 3x3 spatial conv as a (padded grid -> valid grid) matrix per channel:
    #   S[c, (a+ka)*(E+2) + (e+ke), a*E + e] = w_spatial[c, ka, ke]
    a_o = jnp.arange(A)
    e_o = jnp.arange(E)
    cols = (a_o[:, None] * E + e_o[None, :]).reshape(-1)
    S = jnp.zeros((C_OUT, P_pad, AE), jnp.float32)
    for ka in range(KS):
        for ke in range(KS):
            rows = ((a_o[:, None] + ka) * (E + 2) + (e_o[None, :] + ke)).reshape(-1)
            S = S.at[:, rows, cols].add(
                w_spatial.astype(jnp.float32)[:, ka, ke][:, None])

    # Fold the opponent azimuth shift and the mean*(factor_amplification) into the
    # spatial matrix: 4 lane-aligned column blocks of width P2 (padding columns 0).
    #   rd = f1_shift * (s*f2_base) - f2_shift * (s*f1_base) = s * (opponent signal)
    scale = jnp.asarray(amp, jnp.float32) / P2
    S_all = jnp.zeros((P_pad, 4 * LANE), jnp.float32)
    S_all = S_all.at[:, 0 * LANE:0 * LANE + P2].set(S[0, :, 0:P2] * scale)   # ch1 base
    S_all = S_all.at[:, 1 * LANE:1 * LANE + P2].set(S[0, :, E:AE])           # ch1 shift
    S_all = S_all.at[:, 2 * LANE:2 * LANE + P2].set(S[1, :, 0:P2] * scale)   # ch2 base
    S_all = S_all.at[:, 3 * LANE:3 * LANE + P2].set(S[1, :, E:AE])           # ch2 shift
    S_all = S_all.astype(jnp.bfloat16)

    out = pl.pallas_call(
        _simple_model_kernel,
        out_shape=jax.ShapeDtypeStruct((N, T), jnp.float32),
        grid_spec=pltpu.PrefetchScalarGridSpec(
            num_scalar_prefetch=0,
            grid=(N // B_TILE,),
            in_specs=[
                pl.BlockSpec((C_OUT * T, Tp_pad), lambda n: (0, 0)),        # W_cat (resident)
                pl.BlockSpec((P_pad, 4 * LANE), lambda n: (0, 0)),          # S_all (resident)
                pl.BlockSpec((B_TILE, Tp_pad, P_pad), lambda n: (n, 0, 0)),  # batch slab
            ],
            out_specs=pl.BlockSpec((B_TILE, T), lambda n: (n, 0)),          # lane-dense slab
        ),
        compiler_params=pltpu.CompilerParams(
            dimension_semantics=("parallel",),        # batch axis -> megacore on v7x
            vmem_limit_bytes=8 * 1024 * 1024,         # actual need < 1 MiB; headroom
        ),
    )(W_cat, S_all, xt)
    return jnp.squeeze(out)   # mimic torch .squeeze()


def ref_forward(x, w_spatial, w_temporal, amp):
    """Pure-JAX reference that mirrors the PyTorch module op-for-op."""
    T = x.shape[-1]
    xp = jnp.pad(x, ((0, 0), (0, 0), (1, 1), (1, 1), (FL - 1, FL - 1)))
    ws = w_spatial.reshape(C_OUT, 1, KS, KS, 1)
    y = jax.lax.conv_general_dilated(
        xp, ws, (1, 1, 1), 'VALID',
        dimension_numbers=('NCDHW', 'OIDHW', 'NCDHW'),
        precision=jax.lax.Precision.HIGHEST)
    wt = w_temporal.reshape(C_OUT, 1, 1, 1, FL)
    z = jax.lax.conv_general_dilated(
        y, wt, (1, 1, 1), 'VALID',
        dimension_numbers=('NCDHW', 'OIDHW', 'NCDHW'),
        feature_group_count=C_OUT,
        precision=jax.lax.Precision.HIGHEST)
    z = z[..., :T]
    f1, f2 = z[:, 0:1], z[:, 1:2]
    rd = f1[:, :, 1:] * f2[:, :, :-1] - f2[:, :, 1:] * f1[:, :, :-1]
    rd = rd.mean(axis=2).mean(axis=2)
    return jnp.squeeze(amp * rd)


if __name__ == "__main__":
    key = jax.random.PRNGKey(0)
    k1, k2, k3 = jax.random.split(key, 3)

    # Same parameter shapes as the PyTorch module's conv weights with the singleton
    # kernel/channel dims squeezed out:
    #   layer_spatial.weight  : (2, 1, 3, 3, 1)  -> (2, 3, 3)
    #   layer_temporal.weight : (2, 1, 1, 1, 30) -> (2, 30)
    w_spatial = 0.3 * jax.random.normal(k1, (C_OUT, KS, KS), jnp.float32)
    w_temporal = 0.2 * jax.random.normal(k2, (C_OUT, FL), jnp.float32)
    amp = jnp.float32(1.0)   # factor_amplification

    N, A, E, T = 16, 8, 8, 16   # N=16 exercises B_TILE=8 with a 2-step grid
    x = jax.random.normal(k3, (N, 1, A, E, T), jnp.float32)

    out = jax.block_until_ready(
        jax.jit(simple_model_forward)(x, w_spatial, w_temporal, amp))

    ref = ref_forward(x, w_spatial, w_temporal, amp)
    assert out.shape == ref.shape, (out.shape, ref.shape)
    # Tolerance reflects single-pass bf16 MXU inputs vs the f32-HIGHEST reference;
    # structural errors would be ~10x larger than this bound.
    max_err = float(jnp.max(jnp.abs(out - ref)))
    assert jnp.allclose(out, ref, atol=5e-2, rtol=5e-2), max_err
    print("KERNEL_OK")
</pallas_src>

<mosaic_0001>
module attributes {stable_mosaic.version = 11 : i64} {
  func.func @_simple_model_kernel(%arg0: i32, %arg1: memref<32x48xbf16, #tpu.memory_space<vmem>>, %arg2: memref<128x512xbf16, #tpu.memory_space<vmem>>, %arg3: memref<8x48x128xbf16, #tpu.memory_space<vmem>>, %arg4: memref<8x16xf32, #tpu.memory_space<vmem>>) attributes {dimension_semantics = [#tpu.dimension_semantics<parallel>], iteration_bounds = array<i64: 2>, scalar_prefetch = 0 : i64, scratch_operands = 0 : i64, tpu.core_type = #tpu.core_type<tc>, window_params = [{pipeline_mode = #tpu.pipeline_mode<synchronous>, transform_indices = @transform_0, window_bounds = array<i64: 32, 48>}, {pipeline_mode = #tpu.pipeline_mode<synchronous>, transform_indices = @transform_1, window_bounds = array<i64: 128, 512>}, {transform_indices = @transform_2, window_bounds = array<i64: 8, 48, 128>}, {transform_indices = @transform_3, window_bounds = array<i64: 8, 16>}]} {
    %c0 = arith.constant 0 : index
    %c0_0 = arith.constant 0 : index
    %0 = vector.load %arg1[%c0, %c0_0] : memref<32x48xbf16, #tpu.memory_space<vmem>>, vector<32x48xbf16>
    %c0_1 = arith.constant 0 : index
    %c0_2 = arith.constant 0 : index
    %1 = vector.load %arg2[%c0_1, %c0_2] : memref<128x512xbf16, #tpu.memory_space<vmem>>, vector<128x512xbf16>
    %c0_3 = arith.constant 0 : index
    %c0_4 = arith.constant 0 : index
    %c0_5 = arith.constant 0 : index
    %2 = vector.load %arg3[%c0_3, %c0_4, %c0_5] : memref<8x48x128xbf16, #tpu.memory_space<vmem>>, vector<1x48x128xbf16>
    %3 = vector.shape_cast %2 : vector<1x48x128xbf16> to vector<48x128xbf16>
    %cst = arith.constant dense<0.000000e+00> : vector<32x128xf32>
    %4 = tpu.matmul %0, %3, %cst {dimension_numbers = #tpu.dot_dimension_numbers<[1], [0], [0], [1], [0, 0, 1, 1], [], []>} : vector<32x48xbf16>, vector<48x128xbf16>, vector<32x128xf32> -> vector<32x128xf32>
    %5 = arith.truncf %4 : vector<32x128xf32> to vector<32x128xbf16>
    %cst_6 = arith.constant dense<0.000000e+00> : vector<32x512xf32>
    %6 = tpu.matmul %5, %1, %cst_6 {dimension_numbers = #tpu.dot_dimension_numbers<[1], [0], [0], [1], [0, 0, 1, 1], [], []>} : vector<32x128xbf16>, vector<128x512xbf16>, vector<32x512xf32> -> vector<32x512xf32>
    %7 = vector.extract_strided_slice %6 {offsets = [0, 0], sizes = [16, 128], strides = [1, 1]} : vector<32x512xf32> to vector<16x128xf32>
    %8 = vector.extract_strided_slice %6 {offsets = [0, 128], sizes = [16, 128], strides = [1, 1]} : vector<32x512xf32> to vector<16x128xf32>
    %9 = vector.extract_strided_slice %6 {offsets = [16, 256], sizes = [16, 128], strides = [1, 1]} : vector<32x512xf32> to vector<16x128xf32>
    %10 = vector.extract_strided_slice %6 {offsets = [16, 384], sizes = [16, 128], strides = [1, 1]} : vector<32x512xf32> to vector<16x128xf32>
    %11 = arith.mulf %8, %9 : vector<16x128xf32>
    %12 = arith.mulf %10, %7 : vector<16x128xf32>
    %13 = arith.subf %11, %12 : vector<16x128xf32>
    %cst_7 = arith.constant dense<0.000000e+00> : vector<16xf32>
    %14 = vector.multi_reduction <add>, %13, %cst_7 [1] : vector<16x128xf32> to vector<16xf32>
    %c0_8 = arith.constant 0 : index
    %c0_9 = arith.constant 0 : index
    %15 = vector.load %arg4[%c0_8, %c0_9] : memref<8x16xf32, #tpu.memory_space<vmem>>, vector<1x16xf32>
    %16 = vector.shape_cast %15 : vector<1x16xf32> to vector<16xf32>
    %17 = vector.shape_cast %14 : vector<16xf32> to vector<1x16xf32>
    tpu.vector_store %arg4[%c0_8, %c0_9], %17 {strides = array<i32>} : memref<8x16xf32, #tpu.memory_space<vmem>>, vector<1x16xf32>,
    %c1 = arith.constant 1 : index
    %c0_10 = arith.constant 0 : index
    %c0_11 = arith.constant 0 : index
    %18 = vector.load %arg3[%c1, %c0_10, %c0_11] : memref<8x48x128xbf16, #tpu.memory_space<vmem>>, vector<1x48x128xbf16>
    %19 = vector.shape_cast %18 : vector<1x48x128xbf16> to vector<48x128xbf16>
    %cst_12 = arith.constant dense<0.000000e+00> : vector<32x128xf32>
    %20 = tpu.matmul %0, %19, %cst_12 {dimension_numbers = #tpu.dot_dimension_numbers<[1], [0], [0], [1], [0, 0, 1, 1], [], []>} : vector<32x48xbf16>, vector<48x128xbf16>, vector<32x128xf32> -> vector<32x128xf32>
    %21 = arith.truncf %20 : vector<32x128xf32> to vector<32x128xbf16>
    %cst_13 = arith.constant dense<0.000000e+00> : vector<32x512xf32>
    %22 = tpu.matmul %21, %1, %cst_13 {dimension_numbers = #tpu.dot_dimension_numbers<[1], [0], [0], [1], [0, 0, 1, 1], [], []>} : vector<32x128xbf16>, vector<128x512xbf16>, vector<32x512xf32> -> vector<32x512xf32>
    %23 = vector.extract_strided_slice %22 {offsets = [0, 0], sizes = [16, 128], strides = [1, 1]} : vector<32x512xf32> to vector<16x128xf32>
    %24 = vector.extract_strided_slice %22 {offsets = [0, 128], sizes = [16, 128], strides = [1, 1]} : vector<32x512xf32> to vector<16x128xf32>
    %25 = vector.extract_strided_slice %22 {offsets = [16, 256], sizes = [16, 128], strides = [1, 1]} : vector<32x512xf32> to vector<16x128xf32>
    %26 = vector.extract_strided_slice %22 {offsets = [16, 384], sizes = [16, 128], strides = [1, 1]} : vector<32x512xf32> to vector<16x128xf32>
    %27 = arith.mulf %24, %25 : vector<16x128xf32>
    %28 = arith.mulf %26, %23 : vector<16x128xf32>
    %29 = arith.subf %27, %28 : vector<16x128xf32>
    %cst_14 = arith.constant dense<0.000000e+00> : vector<16xf32>
    %30 = vector.multi_reduction <add>, %29, %cst_14 [1] : vector<16x128xf32> to vector<16xf32>
    %c1_15 = arith.constant 1 : index
    %c0_16 = arith.constant 0 : index
    %31 = vector.load %arg4[%c1_15, %c0_16] : memref<8x16xf32, #tpu.memory_space<vmem>>, vector<1x16xf32>
    %32 = vector.shape_cast %31 : vector<1x16xf32> to vector<16xf32>
    %33 = vector.shape_cast %30 : vector<16xf32> to vector<1x16xf32>
    tpu.vector_store %arg4[%c1_15, %c0_16], %33 {strides = array<i32>} : memref<8x16xf32, #tpu.memory_space<vmem>>, vector<1x16xf32>,
    %c2 = arith.constant 2 : index
    %c0_17 = arith.constant 0 : index
    %c0_18 = arith.constant 0 : index
    %34 = vector.load %arg3[%c2, %c0_17, %c0_18] : memref<8x48x128xbf16, #tpu.memory_space<vmem>>, vector<1x48x128xbf16>
    %35 = vector.shape_cast %34 : vector<1x48x128xbf16> to vector<48x128xbf16>
    %cst_19 = arith.constant dense<0.000000e+00> : vector<32x128xf32>
    %36 = tpu.matmul %0, %35, %cst_19 {dimension_numbers = #tpu.dot_dimension_numbers<[1], [0], [0], [1], [0, 0, 1, 1], [], []>} : vector<32x48xbf16>, vector<48x128xbf16>, vector<32x128xf32> -> vector<32x128xf32>
    %37 = arith.truncf %36 : vector<32x128xf32> to vector<32x128xbf16>
    %cst_20 = arith.constant dense<0.000000e+00> : vector<32x512xf32>
    %38 = tpu.matmul %37, %1, %cst_20 {dimension_numbers = #tpu.dot_dimension_numbers<[1], [0], [0], [1], [0, 0, 1, 1], [], []>} : vector<32x128xbf16>, vector<128x512xbf16>, vector<32x512xf32> -> vector<32x512xf32>
    %39 = vector.extract_strided_slice %38 {offsets = [0, 0], sizes = [16, 128], strides = [1, 1]} : vector<32x512xf32> to vector<16x128xf32>
    %40 = vector.extract_strided_slice %38 {offsets = [0, 128], sizes = [16, 128], strides = [1, 1]} : vector<32x512xf32> to vector<16x128xf32>
    %41 = vector.extract_strided_slice %38 {offsets = [16, 256], sizes = [16, 128], strides = [1, 1]} : vector<32x512xf32> to vector<16x128xf32>
    %42 = vector.extract_strided_slice %38 {offsets = [16, 384], sizes = [16, 128], strides = [1, 1]} : vector<32x512xf32> to vector<16x128xf32>
    %43 = arith.mulf %40, %41 : vector<16x128xf32>
    %44 = arith.mulf %42, %39 : vector<16x128xf32>
    %45 = arith.subf %43, %44 : vector<16x128xf32>
    %cst_21 = arith.constant dense<0.000000e+00> : vector<16xf32>
    %46 = vector.multi_reduction <add>, %45, %cst_21 [1] : vector<16x128xf32> to vector<16xf32>
    %c2_22 = arith.constant 2 : index
    %c0_23 = arith.constant 0 : index
    %47 = vector.load %arg4[%c2_22, %c0_23] : memref<8x16xf32, #tpu.memory_space<vmem>>, vector<1x16xf32>
    %48 = vector.shape_cast %47 : vector<1x16xf32> to vector<16xf32>
    %49 = vector.shape_cast %46 : vector<16xf32> to vector<1x16xf32>
    tpu.vector_store %arg4[%c2_22, %c0_23], %49 {strides = array<i32>} : memref<8x16xf32, #tpu.memory_space<vmem>>, vector<1x16xf32>,
    %c3 = arith.constant 3 : index
    %c0_24 = arith.constant 0 : index
    %c0_25 = arith.constant 0 : index
    %50 = vector.load %arg3[%c3, %c0_24, %c0_25] : memref<8x48x128xbf16, #tpu.memory_space<vmem>>, vector<1x48x128xbf16>
    %51 = vector.shape_cast %50 : vector<1x48x128xbf16> to vector<48x128xbf16>
    %cst_26 = arith.constant dense<0.000000e+00> : vector<32x128xf32>
    %52 = tpu.matmul %0, %51, %cst_26 {dimension_numbers = #tpu.dot_dimension_numbers<[1], [0], [0], [1], [0, 0, 1, 1], [], []>} : vector<32x48xbf16>, vector<48x128xbf16>, vector<32x128xf32> -> vector<32x128xf32>
    %53 = arith.truncf %52 : vector<32x128xf32> to vector<32x128xbf16>
    %cst_27 = arith.constant dense<0.000000e+00> : vector<32x512xf32>
    %54 = tpu.matmul %53, %1, %cst_27 {dimension_numbers = #tpu.dot_dimension_numbers<[1], [0], [0], [1], [0, 0, 1, 1], [], []>} : vector<32x128xbf16>, vector<128x512xbf16>, vector<32x512xf32> -> vector<32x512xf32>
    %55 = vector.extract_strided_slice %54 {offsets = [0, 0], sizes = [16, 128], strides = [1, 1]} : vector<32x512xf32> to vector<16x128xf32>
    %56 = vector.extract_strided_slice %54 {offsets = [0, 128], sizes = [16, 128], strides = [1, 1]} : vector<32x512xf32> to vector<16x128xf32>
    %57 = vector.extract_strided_slice %54 {offsets = [16, 256], sizes = [16, 128], strides = [1, 1]} : vector<32x512xf32> to vector<16x128xf32>
    %58 = vector.extract_strided_slice %54 {offsets = [16, 384], sizes = [16, 128], strides = [1, 1]} : vector<32x512xf32> to vector<16x128xf32>
    %59 = arith.mulf %56, %57 : vector<16x128xf32>
    %60 = arith.mulf %58, %55 : vector<16x128xf32>
    %61 = arith.subf %59, %60 : vector<16x128xf32>
    %cst_28 = arith.constant dense<0.000000e+00> : vector<16xf32>
    %62 = vector.multi_reduction <add>, %61, %cst_28 [1] : vector<16x128xf32> to vector<16xf32>
    %c3_29 = arith.constant 3 : index
    %c0_30 = arith.constant 0 : index
    %63 = vector.load %arg4[%c3_29, %c0_30] : memref<8x16xf32, #tpu.memory_space<vmem>>, vector<1x16xf32>
    %64 = vector.shape_cast %63 : vector<1x16xf32> to vector<16xf32>
    %65 = vector.shape_cast %62 : vector<16xf32> to vector<1x16xf32>
    tpu.vector_store %arg4[%c3_29, %c0_30], %65 {strides = array<i32>} : memref<8x16xf32, #tpu.memory_space<vmem>>, vector<1x16xf32>,
    %c4 = arith.constant 4 : index
    %c0_31 = arith.constant 0 : index
    %c0_32 = arith.constant 0 : index
    %66 = vector.load %arg3[%c4, %c0_31, %c0_32] : memref<8x48x128xbf16, #tpu.memory_space<vmem>>, vector<1x48x128xbf16>
    %67 = vector.shape_cast %66 : vector<1x48x128xbf16> to vector<48x128xbf16>
    %cst_33 = arith.constant dense<0.000000e+00> : vector<32x128xf32>
    %68 = tpu.matmul %0, %67, %cst_33 {dimension_numbers = #tpu.dot_dimension_numbers<[1], [0], [0], [1], [0, 0, 1, 1], [], []>} : vector<32x48xbf16>, vector<48x128xbf16>, vector<32x128xf32> -> vector<32x128xf32>
    %69 = arith.truncf %68 : vector<32x128xf32> to vector<32x128xbf16>
    %cst_34 = arith.constant dense<0.000000e+00> : vector<32x512xf32>
    %70 = tpu.matmul %69, %1, %cst_34 {dimension_numbers = #tpu.dot_dimension_numbers<[1], [0], [0], [1], [0, 0, 1, 1], [], []>} : vector<32x128xbf16>, vector<128x512xbf16>, vector<32x512xf32> -> vector<32x512xf32>
    %71 = vector.extract_strided_slice %70 {offsets = [0, 0], sizes = [16, 128], strides = [1, 1]} : vector<32x512xf32> to vector<16x128xf32>
    %72 = vector.extract_strided_slice %70 {offsets = [0, 128], sizes = [16, 128], strides = [1, 1]} : vector<32x512xf32> to vector<16x128xf32>
    %73 = vector.extract_strided_slice %70 {offsets = [16, 256], sizes = [16, 128], strides = [1, 1]} : vector<32x512xf32> to vector<16x128xf32>
    %74 = vector.extract_strided_slice %70 {offsets = [16, 384], sizes = [16, 128], strides = [1, 1]} : vector<32x512xf32> to vector<16x128xf32>
    %75 = arith.mulf %72, %73 : vector<16x128xf32>
    %76 = arith.mulf %74, %71 : vector<16x128xf32>
    %77 = arith.subf %75, %76 : vector<16x128xf32>
    %cst_35 = arith.constant dense<0.000000e+00> : vector<16xf32>
    %78 = vector.multi_reduction <add>, %77, %cst_35 [1] : vector<16x128xf32> to vector<16xf32>
    %c4_36 = arith.constant 4 : index
    %c0_37 = arith.constant 0 : index
    %79 = vector.load %arg4[%c4_36, %c0_37] : memref<8x16xf32, #tpu.memory_space<vmem>>, vector<1x16xf32>
    %80 = vector.shape_cast %79 : vector<1x16xf32> to vector<16xf32>
    %81 = vector.shape_cast %78 : vector<16xf32> to vector<1x16xf32>
    tpu.vector_store %arg4[%c4_36, %c0_37], %81 {strides = array<i32>} : memref<8x16xf32, #tpu.memory_space<vmem>>, vector<1x16xf32>,
    %c5 = arith.constant 5 : index
    %c0_38 = arith.constant 0 : index
    %c0_39 = arith.constant 0 : index
    %82 = vector.load %arg3[%c5, %c0_38, %c0_39] : memref<8x48x128xbf16, #tpu.memory_space<vmem>>, vector<1x48x128xbf16>
    %83 = vector.shape_cast %82 : vector<1x48x128xbf16> to vector<48x128xbf16>
    %cst_40 = arith.constant dense<0.000000e+00> : vector<32x128xf32>
    %84 = tpu.matmul %0, %83, %cst_40 {dimension_numbers = #tpu.dot_dimension_numbers<[1], [0], [0], [1], [0, 0, 1, 1], [], []>} : vector<32x48xbf16>, vector<48x128xbf16>, vector<32x128xf32> -> vector<32x128xf32>
    %85 = arith.truncf %84 : vector<32x128xf32> to vector<32x128xbf16>
    %cst_41 = arith.constant dense<0.000000e+00> : vector<32x512xf32>
    %86 = tpu.matmul %85, %1, %cst_41 {dimension_numbers = #tpu.dot_dimension_numbers<[1], [0], [0], [1], [0, 0, 1, 1], [], []>} : vector<32x128xbf16>, vector<128x512xbf16>, vector<32x512xf32> -> vector<32x512xf32>
    %87 = vector.extract_strided_slice %86 {offsets = [0, 0], sizes = [16, 128], strides = [1, 1]} : vector<32x512xf32> to vector<16x128xf32>
    %88 = vector.extract_strided_slice %86 {offsets = [0, 128], sizes = [16, 128], strides = [1, 1]} : vector<32x512xf32> to vector<16x128xf32>
    %89 = vector.extract_strided_slice %86 {offsets = [16, 256], sizes = [16, 128], strides = [1, 1]} : vector<32x512xf32> to vector<16x128xf32>
    %90 = vector.extract_strided_slice %86 {offsets = [16, 384], sizes = [16, 128], strides = [1, 1]} : vector<32x512xf32> to vector<16x128xf32>
    %91 = arith.mulf %88, %89 : vector<16x128xf32>
    %92 = arith.mulf %90, %87 : vector<16x128xf32>
    %93 = arith.subf %91, %92 : vector<16x128xf32>
    %cst_42 = arith.constant dense<0.000000e+00> : vector<16xf32>
    %94 = vector.multi_reduction <add>, %93, %cst_42 [1] : vector<16x128xf32> to vector<16xf32>
    %c5_43 = arith.constant 5 : index
    %c0_44 = arith.constant 0 : index
    %95 = vector.load %arg4[%c5_43, %c0_44] : memref<8x16xf32, #tpu.memory_space<vmem>>, vector<1x16xf32>
    %96 = vector.shape_cast %95 : vector<1x16xf32> to vector<16xf32>
    %97 = vector.shape_cast %94 : vector<16xf32> to vector<1x16xf32>
    tpu.vector_store %arg4[%c5_43, %c0_44], %97 {strides = array<i32>} : memref<8x16xf32, #tpu.memory_space<vmem>>, vector<1x16xf32>,
    %c6 = arith.constant 6 : index
    %c0_45 = arith.constant 0 : index
    %c0_46 = arith.constant 0 : index
    %98 = vector.load %arg3[%c6, %c0_45, %c0_46] : memref<8x48x128xbf16, #tpu.memory_space<vmem>>, vector<1x48x128xbf16>
    %99 = vector.shape_cast %98 : vector<1x48x128xbf16> to vector<48x128xbf16>
    %cst_47 = arith.constant dense<0.000000e+00> : vector<32x128xf32>
    %100 = tpu.matmul %0, %99, %cst_47 {dimension_numbers = #tpu.dot_dimension_numbers<[1], [0], [0], [1], [0, 0, 1, 1], [], []>} : vector<32x48xbf16>, vector<48x128xbf16>, vector<32x128xf32> -> vector<32x128xf32>
    %101 = arith.truncf %100 : vector<32x128xf32> to vector<32x128xbf16>
    %cst_48 = arith.constant dense<0.000000e+00> : vector<32x512xf32>
    %102 = tpu.matmul %101, %1, %cst_48 {dimension_numbers = #tpu.dot_dimension_numbers<[1], [0], [0], [1], [0, 0, 1, 1], [], []>} : vector<32x128xbf16>, vector<128x512xbf16>, vector<32x512xf32> -> vector<32x512xf32>
    %103 = vector.extract_strided_slice %102 {offsets = [0, 0], sizes = [16, 128], strides = [1, 1]} : vector<32x512xf32> to vector<16x128xf32>
    %104 = vector.extract_strided_slice %102 {offsets = [0, 128], sizes = [16, 128], strides = [1, 1]} : vector<32x512xf32> to vector<16x128xf32>
    %105 = vector.extract_strided_slice %102 {offsets = [16, 256], sizes = [16, 128], strides = [1, 1]} : vector<32x512xf32> to vector<16x128xf32>
    %106 = vector.extract_strided_slice %102 {offsets = [16, 384], sizes = [16, 128], strides = [1, 1]} : vector<32x512xf32> to vector<16x128xf32>
    %107 = arith.mulf %104, %105 : vector<16x128xf32>
    %108 = arith.mulf %106, %103 : vector<16x128xf32>
    %109 = arith.subf %107, %108 : vector<16x128xf32>
    %cst_49 = arith.constant dense<0.000000e+00> : vector<16xf32>
    %110 = vector.multi_reduction <add>, %109, %cst_49 [1] : vector<16x128xf32> to vector<16xf32>
    %c6_50 = arith.constant 6 : index
    %c0_51 = arith.constant 0 : index
    %111 = vector.load %arg4[%c6_50, %c0_51] : memref<8x16xf32, #tpu.memory_space<vmem>>, vector<1x16xf32>
    %112 = vector.shape_cast %111 : vector<1x16xf32> to vector<16xf32>
    %113 = vector.shape_cast %110 : vector<16xf32> to vector<1x16xf32>
    tpu.vector_store %arg4[%c6_50, %c0_51], %113 {strides = array<i32>} : memref<8x16xf32, #tpu.memory_space<vmem>>, vector<1x16xf32>,
    %c7 = arith.constant 7 : index
    %c0_52 = arith.constant 0 : index
    %c0_53 = arith.constant 0 : index
    %114 = vector.load %arg3[%c7, %c0_52, %c0_53] : memref<8x48x128xbf16, #tpu.memory_space<vmem>>, vector<1x48x128xbf16>
    %115 = vector.shape_cast %114 : vector<1x48x128xbf16> to vector<48x128xbf16>
    %cst_54 = arith.constant dense<0.000000e+00> : vector<32x128xf32>
    %116 = tpu.matmul %0, %115, %cst_54 {dimension_numbers = #tpu.dot_dimension_numbers<[1], [0], [0], [1], [0, 0, 1, 1], [], []>} : vector<32x48xbf16>, vector<48x128xbf16>, vector<32x128xf32> -> vector<32x128xf32>
    %117 = arith.truncf %116 : vector<32x128xf32> to vector<32x128xbf16>
    %cst_55 = arith.constant dense<0.000000e+00> : vector<32x512xf32>
    %118 = tpu.matmul %117, %1, %cst_55 {dimension_numbers = #tpu.dot_dimension_numbers<[1], [0], [0], [1], [0, 0, 1, 1], [], []>} : vector<32x128xbf16>, vector<128x512xbf16>, vector<32x512xf32> -> vector<32x512xf32>
    %119 = vector.extract_strided_slice %118 {offsets = [0, 0], sizes = [16, 128], strides = [1, 1]} : vector<32x512xf32> to vector<16x128xf32>
    %120 = vector.extract_strided_slice %118 {offsets = [0, 128], sizes = [16, 128], strides = [1, 1]} : vector<32x512xf32> to vector<16x128xf32>
    %121 = vector.extract_strided_slice %118 {offsets = [16, 256], sizes = [16, 128], strides = [1, 1]} : vector<32x512xf32> to vector<16x128xf32>
    %122 = vector.extract_strided_slice %118 {offsets = [16, 384], sizes = [16, 128], strides = [1, 1]} : vector<32x512xf32> to vector<16x128xf32>
    %123 = arith.mulf %120, %121 : vector<16x128xf32>
    %124 = arith.mulf %122, %119 : vector<16x128xf32>
    %125 = arith.subf %123, %124 : vector<16x128xf32>
    %cst_56 = arith.constant dense<0.000000e+00> : vector<16xf32>
    %126 = vector.multi_reduction <add>, %125, %cst_56 [1] : vector<16x128xf32> to vector<16xf32>
    %c7_57 = arith.constant 7 : index
    %c0_58 = arith.constant 0 : index
    %127 = vector.load %arg4[%c7_57, %c0_58] : memref<8x16xf32, #tpu.memory_space<vmem>>, vector<1x16xf32>
    %128 = vector.shape_cast %127 : vector<1x16xf32> to vector<16xf32>
    %129 = vector.shape_cast %126 : vector<16xf32> to vector<1x16xf32>
    tpu.vector_store %arg4[%c7_57, %c0_58], %129 {strides = array<i32>} : memref<8x16xf32, #tpu.memory_space<vmem>>, vector<1x16xf32>,
    return
  }
  func.func @transform_0(%arg0: i32) -> (i32, i32) {
    %c0_i32 = arith.constant 0 : i32
    %c0_i32_0 = arith.constant 0 : i32
    %c0_i32_1 = arith.constant 0 : i32
    return %c0_i32, %c0_i32_0 : i32, i32
  }
  func.func @transform_1(%arg0: i32) -> (i32, i32) {
    %c0_i32 = arith.constant 0 : i32
    %c0_i32_0 = arith.constant 0 : i32
    %c0_i32_1 = arith.constant 0 : i32
    return %c0_i32, %c0_i32_0 : i32, i32
  }
  func.func @transform_2(%arg0: i32) -> (i32, i32, i32) {
    %c0_i32 = arith.constant 0 : i32
    %c0_i32_0 = arith.constant 0 : i32
    %c0_i32_1 = arith.constant 0 : i32
    return %arg0, %c0_i32, %c0_i32_0 : i32, i32, i32
  }
  func.func @transform_3(%arg0: i32) -> (i32, i32) {
    %c0_i32 = arith.constant 0 : i32
    %c0_i32_0 = arith.constant 0 : i32
    return %arg0, %c0_i32 : i32, i32
  }
}

</mosaic_0001>

<llo_original>
// kernel: simple_model_forward.1
$region0: #{simple_model_forward.1}
  #allocation0 [shape = 'u32[]', space=smem, size = 0x4, offset = 0x4, fixed_abs, tag = 'smem constant byte address 0x4 - core index']
  #allocation1 [shape = 'u32[144,128]{1,0:T(1,128)}', space=vmem, size = 0x12000, scoped, tag = 'internal scratch']
  %s0 = inlined_call_operand.vmem [shape: bf16[32,48], index: 0, kind: input, shape index: {}]
  %s1 = inlined_call_operand.vmem [shape: bf16[128,512], index: 1, kind: input, shape index: {}]
  %s2 = inlined_call_operand.vmem [shape: bf16[16,48,128], index: 2, kind: input, shape index: {}]
  %s3 = inlined_call_operand.hbm [shape: f32[16,16], index: 3, kind: output, shape index: {}]
  %s4 = sld [smem:[#allocation0]]
  $region45: #{simple_model_forward.1} parent=0
    _
  %s6 = ssub.s32 1, %s4
  %s7 = scalar_select 0, %s6, %s4
  $region1: #{simple_model_forward.1} parent=0
    #allocation2 [shape = 'u8[8192]{0}', space=vmem, size = 0x2000, scoped, tag = 'output window, operand 0']
    #allocation3 [shape = 's32[2]{0}', space=sflag, size = 0x8, scoped, tag = 'scoped memory for simple_model_forward.1']
    %8 = vsyncpa [#allocation3], 0
    %s9 = scalar_lea.sflag [#allocation3], 1
    %10 = vsyncpa %s9, 0
    loop: start=0, step=1, limit=4
    $region2: #{simple_model_forward.1} parent=1 // loop_pre_header
      _
    $region3: #{simple_model_forward.1} parent=1 // loop_header
      %s12 = sphi 0, %s16
      %p13 = scmp.ge.s32.totalorder %s12, 4
      %s20 = sphi 0, %s20
      %s22 = sphi 0, %s20
      %s23 = sphi 0, %s22
      %s37 = sphi 0, %s23
      %s41 = sphi 0, %s41
      %s43 = sphi 0, %s41
      %s44 = sphi 0, %s43
      %s58 = sphi 0, %s44
      %s64 = sphi 0, %s66
      %s67 = sphi 0, %s64
      %s68 = sphi 0, %s67
      %s84 = sphi 0, %s68
      %s90 = sphi 0, %s92
      %s93 = sphi 0, %s90
      %s94 = sphi 0, %s93
      %s110 = sphi 0, %s94
    $region4: #{simple_model_forward.1} parent=1 // loop_header_branch
      %15 = sbr.rel (%p13) target = $region8
    $region5: #{simple_model_forward.1} parent=1 // loop_body
      %s17 = ssub.s32 %s12, 1
      %s18 = ssub.s32 %s12, 2
      %s19 = sadd.s32 %s12, 1
      %s21 = sadd.s32 %s20, 1
      %p24 = scmp.eq.s32.totalorder %s12, 1
      %p25 = scmp.ne.s32.totalorder %s20, %s22
      %p26 = scmp.eq.s32.totalorder %s12, 0
      %p27 = por %p25, %p26
      %p28 = scmp.ne.s32.totalorder %s20, %s22
      %p29 = scmp.eq.s32.totalorder %s17, 1
      %p30 = por %p28, %p29
      %p31 = scmp.ne.s32.totalorder %s22, %s23
      %p32 = scmp.eq.s32.totalorder %s17, 0
      %p33 = por %p31, %p32
      %p34 = scmp.ne.s32.totalorder %s22, %s23
      %p35 = scmp.eq.s32.totalorder %s18, 1
      %p36 = por %p34, %p35
      %p38 = scmp.ne.s32.totalorder %s23, %s37
      %p39 = scmp.eq.s32.totalorder %s18, 0
      %p40 = por %p38, %p39
      %s42 = sadd.s32 %s41, 1
      %p45 = scmp.eq.s32.totalorder %s12, 1
      %p46 = scmp.ne.s32.totalorder %s41, %s43
      %p47 = scmp.eq.s32.totalorder %s12, 0
      %p48 = por %p46, %p47
      %p49 = scmp.ne.s32.totalorder %s41, %s43
      %p50 = scmp.eq.s32.totalorder %s17, 1
      %p51 = por %p49, %p50
      %p52 = scmp.ne.s32.totalorder %s43, %s44
      %p53 = scmp.eq.s32.totalorder %s17, 0
      %p54 = por %p52, %p53
      %p55 = scmp.ne.s32.totalorder %s43, %s44
      %p56 = scmp.eq.s32.totalorder %s18, 1
      %p57 = por %p55, %p56
      %p59 = scmp.ne.s32.totalorder %s44, %s58
      %p60 = scmp.eq.s32.totalorder %s18, 0
      %p61 = por %p59, %p60
      %s62 = ssub.s32 %s12, %s19
      %p63 = scmp.eq.s32.totalorder %s62, 0
      %s65 = sadd.s32 %s64, 1
      %s66 = scalar_select %p63, %s64, %s65
      %p69 = pneg %p63
      %p70 = scmp.eq.s32.totalorder %s12, 1
      %p71 = por %p69, %p70
      %p72 = scmp.ne.s32.totalorder %s64, %s67
      %p73 = scmp.eq.s32.totalorder %s12, 0
      %p74 = por %p72, %p73
      %p75 = scmp.ne.s32.totalorder %s64, %s67
      %p76 = scmp.eq.s32.totalorder %s17, 1
      %p77 = por %p75, %p76
      %p78 = scmp.ne.s32.totalorder %s67, %s68
      %p79 = scmp.eq.s32.totalorder %s17, 0
      %p80 = por %p78, %p79
      %p81 = scmp.ne.s32.totalorder %s67, %s68
      %p82 = scmp.eq.s32.totalorder %s18, 1
      %p83 = por %p81, %p82
      %p85 = scmp.ne.s32.totalorder %s68, %s84
      %p86 = scmp.eq.s32.totalorder %s18, 0
      %p87 = por %p85, %p86
      %s88 = ssub.s32 %s12, %s19
      %p89 = scmp.eq.s32.totalorder %s88, 0
      %s91 = sadd.s32 %s90, 1
      %s92 = scalar_select %p89, %s90, %s91
      %p95 = pneg %p89
      %p96 = scmp.eq.s32.totalorder %s12, 1
      %p97 = por %p95, %p96
      %p98 = scmp.ne.s32.totalorder %s90, %s93
      %p99 = scmp.eq.s32.totalorder %s12, 0
      %p100 = por %p98, %p99
      %p101 = scmp.ne.s32.totalorder %s90, %s93
      %p102 = scmp.eq.s32.totalorder %s17, 1
      %p103 = por %p101, %p102
      %p104 = scmp.ne.s32.totalorder %s93, %s94
      %p105 = scmp.eq.s32.totalorder %s17, 0
      %p106 = por %p104, %p105
      %p107 = scmp.ne.s32.totalorder %s93, %s94
      %p108 = scmp.eq.s32.totalorder %s18, 1
      %p109 = por %p107, %p108
      %p111 = scmp.ne.s32.totalorder %s94, %s110
      %p112 = scmp.eq.s32.totalorder %s18, 0
      %p113 = por %p111, %p112
      %p114 = scmp.le.s32.totalorder 1, %s12
      %p115 = scmp.lt.s32.totalorder %s12, 3
      %p116 = pnand %p114, %p115
      %p117 = pneg %p116
      // Predicated region
      $region9: #{simple_model_forward.1} parent=5 // pred_check
        _
      $region10: #{simple_model_forward.1} parent=5 // pred_check_branch
        %119 = sbr.rel (%p116) target = $region12
      $region11: #{simple_model_forward.1} parent=5 // pred_region
        %s120 = ssub.s32 %s12, 1
        // Predicated region
        $region13: #{simple_model_forward.1} parent=11 // pred_check
          %p121 = pneg %p33
        $region14: #{simple_model_forward.1} parent=11 // pred_check_branch
          %123 = sbr.rel (%p121) target = $region16
        $region15: #{simple_model_forward.1} parent=11 // pred_region
          _
        $region16: #{simple_model_forward.1} parent=11 // pred_fallthru
          _
        // Predicated region
        $region17: #{simple_model_forward.1} parent=11 // pred_check
          %p124 = pneg %p54
        $region18: #{simple_model_forward.1} parent=11 // pred_check_branch
          %126 = sbr.rel (%p124) target = $region20
        $region19: #{simple_model_forward.1} parent=11 // pred_region
          _
        $region20: #{simple_model_forward.1} parent=11 // pred_fallthru
          _
      $region12: #{simple_model_forward.1} parent=5 // pred_fallthru
        _
      %p127 = scmp.lt.s32.totalorder %s12, 2
      // Predicated region
      $region21: #{simple_model_forward.1} parent=5 // pred_check
        %p128 = pneg %p127
      $region22: #{simple_model_forward.1} parent=5 // pred_check_branch
        %130 = sbr.rel (%p128) target = $region24
      $region23: #{simple_model_forward.1} parent=5 // pred_region
        // Predicated region
        $region25: #{simple_model_forward.1} parent=23 // pred_check
          %p131 = pneg %p74
        $region26: #{simple_model_forward.1} parent=23 // pred_check_branch
          %133 = sbr.rel (%p131) target = $region28
        $region27: #{simple_model_forward.1} parent=23 // pred_region
          %s134 = smul.u32 8, %s12
          %p135 = scmp.lt.s32.totalorder %s134, 15
          %s136 = scalar_select %p135, %s134, 15
          %s137 = smul.addr %s136, 6
          %s138 = smul.addr %s137, 4
          %s139 = scalar_lea.vmem %s2, %s138
          %s140 = smul.u32 8, %s12
        $region28: #{simple_model_forward.1} parent=23 // pred_fallthru
          _
      $region24: #{simple_model_forward.1} parent=5 // pred_fallthru
        _
      %p141 = scmp.le.s32.totalorder 1, %s12
      %p142 = scmp.lt.s32.totalorder %s12, 3
      %p143 = pnand %p141, %p142
      %p144 = pneg %p143
      // Predicated region
      $region29: #{simple_model_forward.1} parent=5 // pred_check
        _
      $region30: #{simple_model_forward.1} parent=5 // pred_check_branch
        %146 = sbr.rel (%p143) target = $region32
      $region31: #{simple_model_forward.1} parent=5 // pred_region
        %s147 = ssub.s32 %s12, 1
        %p148 = pneg %p33
        %p149 = pneg %p30
        %p150 = pneg %p54
        %p151 = pneg %p51
        %s152 = smul.u32 8, %s17
        %p153 = scmp.lt.s32.totalorder %s152, 15
        %s154 = scalar_select %p153, %s152, 15
        %s155 = smul.addr %s154, 6
        %s156 = smul.addr %s155, 4
        %s157 = scalar_lea.vmem %s2, %s156
        %p158 = pneg %p80
        %p159 = pneg %p77
        %p160 = pneg %p106
        %p161 = pneg %p103
        %s162 = sand.u32 %s93, 1
        %s163 = scalar_lea.sflag [#allocation3], %s162
        %s164 = sand.u32 %s93, 1
        %s165 = smul.addr %s164, 8
        %s166 = scalar_lea.vmem [#allocation2], %s165
        %s167 = smul.u32 8, %s17
        %p168 = scmp.lt.s32.totalorder %s167, 15
        %s169 = scalar_select %p168, %s167, 15
        %s170 = smul.addr %s169, 6
        %s171 = smul.addr %s170, 4
        %s172 = scalar_lea.vmem %s2, %s171
        %s173 = smul.u32 8, %s17
        %v175 = vld [vmem:[%s0] sm:$0xf]
        %v176 = vld [vmem:[%s0 + $0x4] sm:$0xf]
        %v177 = vld [vmem:[%s0 + $0x8] sm:$0xf]
        %v178 = vld [vmem:[%s0 + $0xc] sm:$0xf]
        %v179 = vld [vmem:[%s1] sm:$0xff]
        %v180 = vld [vmem:[%s1 + $0x8] sm:$0xff]
        %v181 = vld [vmem:[%s1 + $0x10] sm:$0xff]
        %v182 = vld [vmem:[%s1 + $0x18] sm:$0xff]
        %v183 = vld [vmem:[%s1 + $0x20] sm:$0xff]
        %v184 = vld [vmem:[%s1 + $0x28] sm:$0xff]
        %v185 = vld [vmem:[%s1 + $0x30] sm:$0xff]
        %v186 = vld [vmem:[%s1 + $0x38] sm:$0xff]
        %v187 = vld [vmem:[%s1 + $0x40] sm:$0xff]
        %v188 = vld [vmem:[%s1 + $0x48] sm:$0xff]
        %v189 = vld [vmem:[%s1 + $0x50] sm:$0xff]
        %v190 = vld [vmem:[%s1 + $0x58] sm:$0xff]
        %v191 = vld [vmem:[%s1 + $0x60] sm:$0xff]
        %v192 = vld [vmem:[%s1 + $0x68] sm:$0xff]
        %v193 = vld [vmem:[%s1 + $0x70] sm:$0xff]
        %v194 = vld [vmem:[%s1 + $0x78] sm:$0xff]
        %v195 = vld [vmem:[%s1 + $0x80] sm:$0xff]
        %v196 = vld [vmem:[%s1 + $0x88] sm:$0xff]
        %v197 = vld [vmem:[%s1 + $0x90] sm:$0xff]
        %v198 = vld [vmem:[%s1 + $0x98] sm:$0xff]
        %v199 = vld [vmem:[%s1 + $0xa0] sm:$0xff]
        %v200 = vld [vmem:[%s1 + $0xa8] sm:$0xff]
        %v201 = vld [vmem:[%s1 + $0xb0] sm:$0xff]
        %v202 = vld [vmem:[%s1 + $0xb8] sm:$0xff]
        %v203 = vld [vmem:[%s1 + $0xc0] sm:$0xff]
        %v204 = vld [vmem:[%s1 + $0xc8] sm:$0xff]
        %v205 = vld [vmem:[%s1 + $0xd0] sm:$0xff]
        %v206 = vld [vmem:[%s1 + $0xd8] sm:$0xff]
        %v207 = vld [vmem:[%s1 + $0xe0] sm:$0xff]
        %v208 = vld [vmem:[%s1 + $0xe8] sm:$0xff]
        %v209 = vld [vmem:[%s1 + $0xf0] sm:$0xff]
        %v210 = vld [vmem:[%s1 + $0xf8] sm:$0xff]
        %v211 = vld [vmem:[%s172] sm:$0xf]
        %v212 = vld [vmem:[%s172 + $0x4] sm:$0xf]
        %v213 = vld [vmem:[%s172 + $0x8] sm:$0xf]
        %v214 = vld [vmem:[%s172 + $0xc] sm:$0xf]
        %v215 = vld [vmem:[%s172 + $0x10] sm:$0xf]
        %v216 = vld [vmem:[%s172 + $0x14] sm:$0xf]
        %v221 = vunpack.c.l.b16 %v175
        %v222 = vunpack.c.l.b16 %v176
        %v223 = vunpack.c.l.b16 %v177
        %v224 = vunpack.c.l.b16 %v178
        %v225 = vpack.c.b16 %v222, %v221
        %v226 = vpack.c.b16 %v224, %v223
        %v233 = vunpack.c.l.b16 %v211
        %v234 = vunpack.c.l.b16 %v212
        %v235 = vunpack.c.l.b16 %v213
        %v236 = vunpack.c.l.b16 %v214
        %v237 = vunpack.c.l.b16 %v215
        %v238 = vunpack.c.l.b16 %v216
        %v239 = vpack.c.b16 %v234, %v233
        %v240 = vpack.c.b16 %v236, %v235
        %v241 = vpack.c.b16 %v238, %v237
        %vm245 = vcmask 392192
        %v247 = vsel %vm245, %v225, 0
        %v250 = vsel %vm245, %v226, 0
        %252 = vmatprep.subr.bf16.mxu0 0
        %253 = vmatpush1.bf16.msra.mxu0 %v239
        %254 = vmatprep.subr.bf16.mxu0 0
        %255 = vmatpush1.bf16.msra.mxu0 %v240
        %256 = vmatprep.subr.bf16.mxu0 0
        %257 = vmatpush1.bf16.msra.mxu0 %v241
        %258 = vmatprep.subr.bf16.mxu0 0
        %259 = vmatpush1.bf16.msra.mxu0 0
        %260 = vmatprep.subr.bf16.mxu0 0
        %261 = vmatpush1.bf16.msra.mxu0 0
        %262 = vmatprep.subr.bf16.mxu0 0
        %263 = vmatpush1.bf16.msra.mxu0 0
        %264 = vmatprep.subr.bf16.mxu0 0
        %265 = vmatpush1.bf16.msra.mxu0 0
        %266 = vmatprep.subr.bf16.mxu0 0
        %267 = vmatpush1.bf16.msra.mxu0 0
        %268 = vmatprep.subr.bf16.mxu0 0
        %269 = vmatpush1.bf16.msra.mxu0 0
        %270 = vmatprep.subr.bf16.mxu0 0
        %271 = vmatpush1.bf16.msra.mxu0 0
        %272 = vmatprep.subr.bf16.mxu0 0
        %273 = vmatpush1.bf16.msra.mxu0 0
        %274 = vmatprep.subr.bf16.mxu0 0
        %275 = vmatpush1.bf16.msra.mxu0 0
        %276 = vmatprep.subr.bf16.mxu0 0
        %277 = vmatpush1.bf16.msra.mxu0 0
        %278 = vmatprep.subr.bf16.mxu0 0
        %279 = vmatpush1.bf16.msra.mxu0 0
        %280 = vmatprep.subr.bf16.mxu0 0
        %281 = vmatpush1.bf16.msra.mxu0 0
        %282 = vmatprep.subr.bf16.mxu0 0
        %283 = vmatpush1.bf16.msra.mxu0 0
        %284 = vmatprep.mubr.bf16.mxu0 0
        %285 = vmatmul.mubr.bf16.gmra.mrb[0].mxu0 %v247
        %v286 = vpop.f32.mrb[0].mxu0
        %v287 = vadd.f32 0.0, %v286
        %v288 = vpop.f32.mrb[0].mxu0
        %v289 = vpop.f32.mrb[0].mxu0
        %v290 = vadd.f32 0.0, %v289
        %v291 = vpop.f32.mrb[0].mxu0
        %292 = vmatprep.mubr.bf16.mxu0 0
        %293 = vmatmul.mubr.bf16.gmra.mrb[0].mxu0 %v250
        %v294 = vpop.f32.mrb[0].mxu0
        %v295 = vadd.f32 0.0, %v294
        %v296 = vpop.f32.mrb[0].mxu0
        %v297 = vpop.f32.mrb[0].mxu0
        %v298 = vadd.f32 0.0, %v297
        %v299 = vpop.f32.mrb[0].mxu0
        %300 = vdwg.mxu0
        %v301 = vpack.c.bf16 %v290, %v287
        %v302 = vpack.c.bf16 %v298, %v295
        %v335 = vunpack.c.l.b16 %v179
        %v336 = vunpack.c.h.b16 %v179
        %v337 = vunpack.c.l.b16 %v180
        %v338 = vunpack.c.h.b16 %v180
        %v339 = vunpack.c.l.b16 %v181
        %v340 = vunpack.c.h.b16 %v181
        %v341 = vunpack.c.l.b16 %v182
        %v342 = vunpack.c.h.b16 %v182
        %v343 = vunpack.c.l.b16 %v183
        %v344 = vunpack.c.h.b16 %v183
        %v345 = vunpack.c.l.b16 %v184
        %v346 = vunpack.c.h.b16 %v184
        %v347 = vunpack.c.l.b16 %v185
        %v348 = vunpack.c.h.b16 %v185
        %v349 = vunpack.c.l.b16 %v186
        %v350 = vunpack.c.h.b16 %v186
        %v351 = vunpack.c.l.b16 %v187
        %v352 = vunpack.c.h.b16 %v187
        %v353 = vunpack.c.l.b16 %v188
        %v354 = vunpack.c.h.b16 %v188
        %v355 = vunpack.c.l.b16 %v189
        %v356 = vunpack.c.h.b16 %v189
        %v357 = vunpack.c.l.b16 %v190
        %v358 = vunpack.c.h.b16 %v190
        %v359 = vunpack.c.l.b16 %v191
        %v360 = vunpack.c.h.b16 %v191
        %v361 = vunpack.c.l.b16 %v192
        %v362 = vunpack.c.h.b16 %v192
        %v363 = vunpack.c.l.b16 %v193
        %v364 = vunpack.c.h.b16 %v193
        %v365 = vunpack.c.l.b16 %v194
        %v366 = vunpack.c.h.b16 %v194
        %v367 = vunpack.c.l.b16 %v195
        %v368 = vunpack.c.h.b16 %v195
        %v369 = vunpack.c.l.b16 %v196
        %v370 = vunpack.c.h.b16 %v196
        %v371 = vunpack.c.l.b16 %v197
        %v372 = vunpack.c.h.b16 %v197
        %v373 = vunpack.c.l.b16 %v198
        %v374 = vunpack.c.h.b16 %v198
        %v375 = vunpack.c.l.b16 %v199
        %v376 = vunpack.c.h.b16 %v199
        %v377 = vunpack.c.l.b16 %v200
        %v378 = vunpack.c.h.b16 %v200
        %v379 = vunpack.c.l.b16 %v201
        %v380 = vunpack.c.h.b16 %v201
        %v381 = vunpack.c.l.b16 %v202
        %v382 = vunpack.c.h.b16 %v202
        %v383 = vunpack.c.l.b16 %v203
        %v384 = vunpack.c.h.b16 %v203
        %v385 = vunpack.c.l.b16 %v204
        %v386 = vunpack.c.h.b16 %v204
        %v387 = vunpack.c.l.b16 %v205
        %v388 = vunpack.c.h.b16 %v205
        %v389 = vunpack.c.l.b16 %v206
        %v390 = vunpack.c.h.b16 %v206
        %v391 = vunpack.c.l.b16 %v207
        %v392 = vunpack.c.h.b16 %v207
        %v393 = vunpack.c.l.b16 %v208
        %v394 = vunpack.c.h.b16 %v208
        %v395 = vunpack.c.l.b16 %v209
        %v396 = vunpack.c.h.b16 %v209
        %v397 = vunpack.c.l.b16 %v210
        %v398 = vunpack.c.h.b16 %v210
        %v399 = vpack.c.b16 %v339, %v335
        %v400 = vpack.c.b16 %v340, %v336
        %v401 = vpack.c.b16 %v341, %v337
        %v402 = vpack.c.b16 %v342, %v338
        %v403 = vpack.c.b16 %v347, %v343
        %v404 = vpack.c.b16 %v348, %v344
        %v405 = vpack.c.b16 %v349, %v345
        %v406 = vpack.c.b16 %v350, %v346
        %v407 = vpack.c.b16 %v355, %v351
        %v408 = vpack.c.b16 %v356, %v352
        %v409 = vpack.c.b16 %v357, %v353
        %v410 = vpack.c.b16 %v358, %v354
        %v411 = vpack.c.b16 %v363, %v359
        %v412 = vpack.c.b16 %v364, %v360
        %v413 = vpack.c.b16 %v365, %v361
        %v414 = vpack.c.b16 %v366, %v362
        %v415 = vpack.c.b16 %v371, %v367
        %v416 = vpack.c.b16 %v372, %v368
        %v417 = vpack.c.b16 %v373, %v369
        %v418 = vpack.c.b16 %v374, %v370
        %v419 = vpack.c.b16 %v379, %v375
        %v420 = vpack.c.b16 %v380, %v376
        %v421 = vpack.c.b16 %v381, %v377
        %v422 = vpack.c.b16 %v382, %v378
        %v423 = vpack.c.b16 %v387, %v383
        %v424 = vpack.c.b16 %v388, %v384
        %v425 = vpack.c.b16 %v389, %v385
        %v426 = vpack.c.b16 %v390, %v386
        %v427 = vpack.c.b16 %v395, %v391
        %v428 = vpack.c.b16 %v396, %v392
        %v429 = vpack.c.b16 %v397, %v393
        %v430 = vpack.c.b16 %v398, %v394
        %463 = vmatprep.subr.bf16.mxu0 %v400
        %464 = vmatpush1.bf16.msra.mxu0 %v399
        %465 = vmatprep.subr.bf16.mxu0 %v404
        %466 = vmatpush1.bf16.msra.mxu0 %v403
        %467 = vmatprep.subr.bf16.mxu0 %v408
        %468 = vmatpush1.bf16.msra.mxu0 %v407
        %469 = vmatprep.subr.bf16.mxu0 %v412
        %470 = vmatpush1.bf16.msra.mxu0 %v411
        %471 = vmatprep.subr.bf16.mxu0 %v416
        %472 = vmatpush1.bf16.msra.mxu0 %v415
        %473 = vmatprep.subr.bf16.mxu0 %v420
        %474 = vmatpush1.bf16.msra.mxu0 %v419
        %475 = vmatprep.subr.bf16.mxu0 %v424
        %476 = vmatpush1.bf16.msra.mxu0 %v423
        %477 = vmatprep.subr.bf16.mxu0 %v428
        %478 = vmatpush1.bf16.msra.mxu0 %v427
        %479 = vmatprep.subr.bf16.mxu0 0
        %480 = vmatpush1.bf16.msra.mxu0 0
        %481 = vmatprep.subr.bf16.mxu0 0
        %482 = vmatpush1.bf16.msra.mxu0 0
        %483 = vmatprep.subr.bf16.mxu0 0
        %484 = vmatpush1.bf16.msra.mxu0 0
        %485 = vmatprep.subr.bf16.mxu0 0
        %486 = vmatpush1.bf16.msra.mxu0 0
        %487 = vmatprep.subr.bf16.mxu0 0
        %488 = vmatpush1.bf16.msra.mxu0 0
        %489 = vmatprep.subr.bf16.mxu0 0
        %490 = vmatpush1.bf16.msra.mxu0 0
        %491 = vmatprep.subr.bf16.mxu0 0
        %492 = vmatpush1.bf16.msra.mxu0 0
        %493 = vmatprep.subr.bf16.mxu0 0
        %494 = vmatpush1.bf16.msra.mxu0 0
        %495 = vmatprep.mubr.bf16.mxu0 0
        %496 = vmatmul.mubr.bf16.gmra.mrb[0].mxu0 %v301
        %v497 = vpop.f32.mrb[0].mxu0
        %v498 = vadd.f32 0.0, %v497
        %v499 = vpop.f32.mrb[0].mxu0
        %v500 = vadd.f32 0.0, %v499
        %v501 = vpop.f32.mrb[0].mxu0
        %v502 = vadd.f32 0.0, %v501
        %v503 = vpop.f32.mrb[0].mxu0
        %v504 = vadd.f32 0.0, %v503
        %505 = vmatprep.mubr.bf16.mxu0 0
        %506 = vmatmul.mubr.bf16.gmra.mrb[0].mxu0 %v302
        %v507 = vpop.f32.mrb[0].mxu0
        %v508 = vpop.f32.mrb[0].mxu0
        %v509 = vpop.f32.mrb[0].mxu0
        %v510 = vpop.f32.mrb[0].mxu0
        %511 = vdwg.mxu0
        %512 = vmatprep.subr.bf16.mxu0 %v402
        %513 = vmatpush1.bf16.msra.mxu0 %v401
        %514 = vmatprep.subr.bf16.mxu0 %v406
        %515 = vmatpush1.bf16.msra.mxu0 %v405
        %516 = vmatprep.subr.bf16.mxu0 %v410
        %517 = vmatpush1.bf16.msra.mxu0 %v409
        %518 = vmatprep.subr.bf16.mxu0 %v414
        %519 = vmatpush1.bf16.msra.mxu0 %v413
        %520 = vmatprep.subr.bf16.mxu0 %v418
        %521 = vmatpush1.bf16.msra.mxu0 %v417
        %522 = vmatprep.subr.bf16.mxu0 %v422
        %523 = vmatpush1.bf16.msra.mxu0 %v421
        %524 = vmatprep.subr.bf16.mxu0 %v426
        %525 = vmatpush1.bf16.msra.mxu0 %v425
        %526 = vmatprep.subr.bf16.mxu0 %v430
        %527 = vmatpush1.bf16.msra.mxu0 %v429
        %528 = vmatprep.subr.bf16.mxu0 0
        %529 = vmatpush1.bf16.msra.mxu0 0
        %530 = vmatprep.subr.bf16.mxu0 0
        %531 = vmatpush1.bf16.msra.mxu0 0
        %532 = vmatprep.subr.bf16.mxu0 0
        %533 = vmatpush1.bf16.msra.mxu0 0
        %534 = vmatprep.subr.bf16.mxu0 0
        %535 = vmatpush1.bf16.msra.mxu0 0
        %536 = vmatprep.subr.bf16.mxu0 0
        %537 = vmatpush1.bf16.msra.mxu0 0
        %538 = vmatprep.subr.bf16.mxu0 0
        %539 = vmatpush1.bf16.msra.mxu0 0
        %540 = vmatprep.subr.bf16.mxu0 0
        %541 = vmatpush1.bf16.msra.mxu0 0
        %542 = vmatprep.subr.bf16.mxu0 0
        %543 = vmatpush1.bf16.msra.mxu0 0
        %544 = vmatprep.mubr.bf16.mxu0 0
        %545 = vmatmul.mubr.bf16.gmra.mrb[0].mxu0 %v301
        %v546 = vpop.f32.mrb[0].mxu0
        %v547 = vpop.f32.mrb[0].mxu0
        %v548 = vpop.f32.mrb[0].mxu0
        %v549 = vpop.f32.mrb[0].mxu0
        %550 = vmatprep.mubr.bf16.mxu0 0
        %551 = vmatmul.mubr.bf16.gmra.mrb[0].mxu0 %v302
        %v552 = vpop.f32.mrb[0].mxu0
        %v553 = vadd.f32 0.0, %v552
        %v554 = vpop.f32.mrb[0].mxu0
        %v555 = vadd.f32 0.0, %v554
        %v556 = vpop.f32.mrb[0].mxu0
        %v557 = vadd.f32 0.0, %v556
        %v558 = vpop.f32.mrb[0].mxu0
        %v559 = vadd.f32 0.0, %v558
        %560 = vdwg.mxu0
        %v561 = vmul.f32 %v500, %v553
        %v562 = vmul.f32 %v504, %v557
        %v563 = vmul.f32 %v555, %v498
        %v564 = vmul.f32 %v559, %v502
        %v565 = vsub.f32 %v561, %v563
        %v566 = vsub.f32 %v562, %v564
        %567 = vadd.xlane.f32.xlu0 %v565
        %v568 = vpop.xlane.xlu0 %567
        %569 = vadd.xlane.f32.xlu0 %v566
        %v570 = vpop.xlane.xlu0 %569
        %v573 = vlaneseq
        %v574 = vand.u32 %v573, 127
        %v575 = vlaneseq
        %v576 = vshrl.u32 %v575, 7
        %v577 = vsub.s32 %v574, %v576
        %v578 = vrot.slane %v568, %v577
        %v579 = vadd.s32 %v574, 4294967288
        %v580 = vlaneseq
        %v581 = vshrl.u32 %v580, 7
        %v582 = vsub.s32 %v579, %v581
        %v583 = vrot.slane %v570, %v582
        %vm584 = vcmask 130112
        %v585 = vsel %vm584, %v583, %v578
        %vm587 = vcmask 122880
        %588 = vst.msk [vmem:[%s166] sm:$0x1] %vm587, %v585
        %s589 = scalar_lea.vmem %s172, 24
        %v590 = vld [vmem:[%s589] sm:$0xf]
        %v591 = vld [vmem:[%s589 + $0x4] sm:$0xf]
        %v592 = vld [vmem:[%s589 + $0x8] sm:$0xf]
        %v593 = vld [vmem:[%s589 + $0xc] sm:$0xf]
        %v594 = vld [vmem:[%s589 + $0x10] sm:$0xf]
        %v595 = vld [vmem:[%s589 + $0x14] sm:$0xf]
        %v602 = vunpack.c.l.b16 %v590
        %v603 = vunpack.c.l.b16 %v591
        %v604 = vunpack.c.l.b16 %v592
        %v605 = vunpack.c.l.b16 %v593
        %v606 = vunpack.c.l.b16 %v594
        %v607 = vunpack.c.l.b16 %v595
        %v608 = vpack.c.b16 %v603, %v602
        %v609 = vpack.c.b16 %v605, %v604
        %v610 = vpack.c.b16 %v607, %v606
        %614 = vmatprep.subr.bf16.mxu0 0
        %615 = vmatpush1.bf16.msra.mxu0 %v608
        %616 = vmatprep.subr.bf16.mxu0 0
        %617 = vmatpush1.bf16.msra.mxu0 %v609
        %618 = vmatprep.subr.bf16.mxu0 0
        %619 = vmatpush1.bf16.msra.mxu0 %v610
        %620 = vmatprep.subr.bf16.mxu0 0
        %621 = vmatpush1.bf16.msra.mxu0 0
        %622 = vmatprep.subr.bf16.mxu0 0
        %623 = vmatpush1.bf16.msra.mxu0 0
        %624 = vmatprep.subr.bf16.mxu0 0
        %625 = vmatpush1.bf16.msra.mxu0 0
        %626 = vmatprep.subr.bf16.mxu0 0
        %627 = vmatpush1.bf16.msra.mxu0 0
        %628 = vmatprep.subr.bf16.mxu0 0
        %629 = vmatpush1.bf16.msra.mxu0 0
        %630 = vmatprep.subr.bf16.mxu0 0
        %631 = vmatpush1.bf16.msra.mxu0 0
        %632 = vmatprep.subr.bf16.mxu0 0
        %633 = vmatpush1.bf16.msra.mxu0 0
        %634 = vmatprep.subr.bf16.mxu0 0
        %635 = vmatpush1.bf16.msra.mxu0 0
        %636 = vmatprep.subr.bf16.mxu0 0
        %637 = vmatpush1.bf16.msra.mxu0 0
        %638 = vmatprep.subr.bf16.mxu0 0
        %639 = vmatpush1.bf16.msra.mxu0 0
        %640 = vmatprep.subr.bf16.mxu0 0
        %641 = vmatpush1.bf16.msra.mxu0 0
        %642 = vmatprep.subr.bf16.mxu0 0
        %643 = vmatpush1.bf16.msra.mxu0 0
        %644 = vmatprep.subr.bf16.mxu0 0
        %645 = vmatpush1.bf16.msra.mxu0 0
        %646 = vmatprep.mubr.bf16.mxu0 0
        %647 = vmatmul.mubr.bf16.gmra.mrb[0].mxu0 %v247
        %v648 = vpop.f32.mrb[0].mxu0
        %v649 = vadd.f32 0.0, %v648
        %v650 = vpop.f32.mrb[0].mxu0
        %v651 = vpop.f32.mrb[0].mxu0
        %v652 = vadd.f32 0.0, %v651
        %v653 = vpop.f32.mrb[0].mxu0
        %654 = vmatprep.mubr.bf16.mxu0 0
        %655 = vmatmul.mubr.bf16.gmra.mrb[0].mxu0 %v250
        %v656 = vpop.f32.mrb[0].mxu0
        %v657 = vadd.f32 0.0, %v656
        %v658 = vpop.f32.mrb[0].mxu0
        %v659 = vpop.f32.mrb[0].mxu0
        %v660 = vadd.f32 0.0, %v659
        %v661 = vpop.f32.mrb[0].mxu0
        %662 = vdwg.mxu0
        %v663 = vpack.c.bf16 %v652, %v649
        %v664 = vpack.c.bf16 %v660, %v657
        %665 = vmatprep.subr.bf16.mxu0 %v400
        %666 = vmatpush1.bf16.msra.mxu0 %v399
        %667 = vmatprep.subr.bf16.mxu0 %v404
        %668 = vmatpush1.bf16.msra.mxu0 %v403
        %669 = vmatprep.subr.bf16.mxu0 %v408
        %670 = vmatpush1.bf16.msra.mxu0 %v407
        %671 = vmatprep.subr.bf16.mxu0 %v412
        %672 = vmatpush1.bf16.msra.mxu0 %v411
        %673 = vmatprep.subr.bf16.mxu0 %v416
        %674 = vmatpush1.bf16.msra.mxu0 %v415
        %675 = vmatprep.subr.bf16.mxu0 %v420
        %676 = vmatpush1.bf16.msra.mxu0 %v419
        %677 = vmatprep.subr.bf16.mxu0 %v424
        %678 = vmatpush1.bf16.msra.mxu0 %v423
        %679 = vmatprep.subr.bf16.mxu0 %v428
        %680 = vmatpush1.bf16.msra.mxu0 %v427
        %681 = vmatprep.subr.bf16.mxu0 0
        %682 = vmatpush1.bf16.msra.mxu0 0
        %683 = vmatprep.subr.bf16.mxu0 0
        %684 = vmatpush1.bf16.msra.mxu0 0
        %685 = vmatprep.subr.bf16.mxu0 0
        %686 = vmatpush1.bf16.msra.mxu0 0
        %687 = vmatprep.subr.bf16.mxu0 0
        %688 = vmatpush1.bf16.msra.mxu0 0
        %689 = vmatprep.subr.bf16.mxu0 0
        %690 = vmatpush1.bf16.msra.mxu0 0
        %691 = vmatprep.subr.bf16.mxu0 0
        %692 = vmatpush1.bf16.msra.mxu0 0
        %693 = vmatprep.subr.bf16.mxu0 0
        %694 = vmatpush1.bf16.msra.mxu0 0
        %695 = vmatprep.subr.bf16.mxu0 0
        %696 = vmatpush1.bf16.msra.mxu0 0
        %697 = vmatprep.mubr.bf16.mxu0 0
        %698 = vmatmul.mubr.bf16.gmra.mrb[0].mxu0 %v663
        %v699 = vpop.f32.mrb[0].mxu0
        %v700 = vadd.f32 0.0, %v699
        %v701 = vpop.f32.mrb[0].mxu0
        %v702 = vadd.f32 0.0, %v701
        %v703 = vpop.f32.mrb[0].mxu0
        %v704 = vadd.f32 0.0, %v703
        %v705 = vpop.f32.mrb[0].mxu0
        %v706 = vadd.f32 0.0, %v705
        %707 = vmatprep.mubr.bf16.mxu0 0
        %708 = vmatmul.mubr.bf16.gmra.mrb[0].mxu0 %v664
        %v709 = vpop.f32.mrb[0].mxu0
        %v710 = vpop.f32.mrb[0].mxu0
        %v711 = vpop.f32.mrb[0].mxu0
        %v712 = vpop.f32.mrb[0].mxu0
        %713 = vdwg.mxu0
        %714 = vmatprep.subr.bf16.mxu0 %v402
        %715 = vmatpush1.bf16.msra.mxu0 %v401
        %716 = vmatprep.subr.bf16.mxu0 %v406
        %717 = vmatpush1.bf16.msra.mxu0 %v405
        %718 = vmatprep.subr.bf16.mxu0 %v410
        %719 = vmatpush1.bf16.msra.mxu0 %v409
        %720 = vmatprep.subr.bf16.mxu0 %v414
        %721 = vmatpush1.bf16.msra.mxu0 %v413
        %722 = vmatprep.subr.bf16.mxu0 %v418
        %723 = vmatpush1.bf16.msra.mxu0 %v417
        %724 = vmatprep.subr.bf16.mxu0 %v422
        %725 = vmatpush1.bf16.msra.mxu0 %v421
        %726 = vmatprep.subr.bf16.mxu0 %v426
        %727 = vmatpush1.bf16.msra.mxu0 %v425
        %728 = vmatprep.subr.bf16.mxu0 %v430
        %729 = vmatpush1.bf16.msra.mxu0 %v429
        %730 = vmatprep.subr.bf16.mxu0 0
        %731 = vmatpush1.bf16.msra.mxu0 0
        %732 = vmatprep.subr.bf16.mxu0 0
        %733 = vmatpush1.bf16.msra.mxu0 0
        %734 = vmatprep.subr.bf16.mxu0 0
        %735 = vmatpush1.bf16.msra.mxu0 0
        %736 = vmatprep.subr.bf16.mxu0 0
        %737 = vmatpush1.bf16.msra.mxu0 0
        %738 = vmatprep.subr.bf16.mxu0 0
        %739 = vmatpush1.bf16.msra.mxu0 0
        %740 = vmatprep.subr.bf16.mxu0 0
        %741 = vmatpush1.bf16.msra.mxu0 0
        %742 = vmatprep.subr.bf16.mxu0 0
        %743 = vmatpush1.bf16.msra.mxu0 0
        %744 = vmatprep.subr.bf16.mxu0 0
        %745 = vmatpush1.bf16.msra.mxu0 0
        %746 = vmatprep.mubr.bf16.mxu0 0
        %747 = vmatmul.mubr.bf16.gmra.mrb[0].mxu0 %v663
        %v748 = vpop.f32.mrb[0].mxu0
        %v749 = vpop.f32.mrb[0].mxu0
        %v750 = vpop.f32.mrb[0].mxu0
        %v751 = vpop.f32.mrb[0].mxu0
        %752 = vmatprep.mubr.bf16.mxu0 0
        %753 = vmatmul.mubr.bf16.gmra.mrb[0].mxu0 %v664
        %v754 = vpop.f32.mrb[0].mxu0
        %v755 = vadd.f32 0.0, %v754
        %v756 = vpop.f32.mrb[0].mxu0
        %v757 = vadd.f32 0.0, %v756
        %v758 = vpop.f32.mrb[0].mxu0
        %v759 = vadd.f32 0.0, %v758
        %v760 = vpop.f32.mrb[0].mxu0
        %v761 = vadd.f32 0.0, %v760
        %762 = vdwg.mxu0
        %v763 = vmul.f32 %v702, %v755
        %v764 = vmul.f32 %v706, %v759
        %v765 = vmul.f32 %v757, %v700
        %v766 = vmul.f32 %v761, %v704
        %v767 = vsub.f32 %v763, %v765
        %v768 = vsub.f32 %v764, %v766
        %769 = vadd.xlane.f32.xlu0 %v767
        %v770 = vpop.xlane.xlu0 %769
        %771 = vadd.xlane.f32.xlu0 %v768
        %v772 = vpop.xlane.xlu0 %771
        %v775 = vlaneseq
        %v776 = vshrl.u32 %v775, 7
        %v777 = vsub.s32 %v574, %v776
        %v778 = vrot.slane %v770, %v777
        %v779 = vlaneseq
        %v780 = vshrl.u32 %v779, 7
        %v781 = vsub.s32 %v579, %v780
        %v782 = vrot.slane %v772, %v781
        %v783 = vsel %vm584, %v782, %v778
        %785 = vst.msk [vmem:[%s166 + $0x1] sm:$0x1] %vm587, %v783
        %s786 = scalar_lea.vmem %s172, 48
        %v787 = vld [vmem:[%s786] sm:$0xf]
        %v788 = vld [vmem:[%s786 + $0x4] sm:$0xf]
        %v789 = vld [vmem:[%s786 + $0x8] sm:$0xf]
        %v790 = vld [vmem:[%s786 + $0xc] sm:$0xf]
        %v791 = vld [vmem:[%s786 + $0x10] sm:$0xf]
        %v792 = vld [vmem:[%s786 + $0x14] sm:$0xf]
        %v799 = vunpack.c.l.b16 %v787
        %v800 = vunpack.c.l.b16 %v788
        %v801 = vunpack.c.l.b16 %v789
        %v802 = vunpack.c.l.b16 %v790
        %v803 = vunpack.c.l.b16 %v791
        %v804 = vunpack.c.l.b16 %v792
        %v805 = vpack.c.b16 %v800, %v799
        %v806 = vpack.c.b16 %v802, %v801
        %v807 = vpack.c.b16 %v804, %v803
        %811 = vmatprep.subr.bf16.mxu0 0
        %812 = vmatpush1.bf16.msra.mxu0 %v805
        %813 = vmatprep.subr.bf16.mxu0 0
        %814 = vmatpush1.bf16.msra.mxu0 %v806
        %815 = vmatprep.subr.bf16.mxu0 0
        %816 = vmatpush1.bf16.msra.mxu0 %v807
        %817 = vmatprep.subr.bf16.mxu0 0
        %818 = vmatpush1.bf16.msra.mxu0 0
        %819 = vmatprep.subr.bf16.mxu0 0
        %820 = vmatpush1.bf16.msra.mxu0 0
        %821 = vmatprep.subr.bf16.mxu0 0
        %822 = vmatpush1.bf16.msra.mxu0 0
        %823 = vmatprep.subr.bf16.mxu0 0
        %824 = vmatpush1.bf16.msra.mxu0 0
        %825 = vmatprep.subr.bf16.mxu0 0
        %826 = vmatpush1.bf16.msra.mxu0 0
        %827 = vmatprep.subr.bf16.mxu0 0
        %828 = vmatpush1.bf16.msra.mxu0 0
        %829 = vmatprep.subr.bf16.mxu0 0
        %830 = vmatpush1.bf16.msra.mxu0 0
        %831 = vmatprep.subr.bf16.mxu0 0
        %832 = vmatpush1.bf16.msra.mxu0 0
        %833 = vmatprep.subr.bf16.mxu0 0
        %834 = vmatpush1.bf16.msra.mxu0 0
        %835 = vmatprep.subr.bf16.mxu0 0
        %836 = vmatpush1.bf16.msra.mxu0 0
        %837 = vmatprep.subr.bf16.mxu0 0
        %838 = vmatpush1.bf16.msra.mxu0 0
        %839 = vmatprep.subr.bf16.mxu0 0
        %840 = vmatpush1.bf16.msra.mxu0 0
        %841 = vmatprep.subr.bf16.mxu0 0
        %842 = vmatpush1.bf16.msra.mxu0 0
        %843 = vmatprep.mubr.bf16.mxu0 0
        %844 = vmatmul.mubr.bf16.gmra.mrb[0].mxu0 %v247
        %v845 = vpop.f32.mrb[0].mxu0
        %v846 = vadd.f32 0.0, %v845
        %v847 = vpop.f32.mrb[0].mxu0
        %v848 = vpop.f32.mrb[0].mxu0
        %v849 = vadd.f32 0.0, %v848
        %v850 = vpop.f32.mrb[0].mxu0
        %851 = vmatprep.mubr.bf16.mxu0 0
        %852 = vmatmul.mubr.bf16.gmra.mrb[0].mxu0 %v250
        %v853 = vpop.f32.mrb[0].mxu0
        %v854 = vadd.f32 0.0, %v853
        %v855 = vpop.f32.mrb[0].mxu0
        %v856 = vpop.f32.mrb[0].mxu0
        %v857 = vadd.f32 0.0, %v856
        %v858 = vpop.f32.mrb[0].mxu0
        %859 = vdwg.mxu0
        %v860 = vpack.c.bf16 %v849, %v846
        %v861 = vpack.c.bf16 %v857, %v854
        %862 = vmatprep.subr.bf16.mxu0 %v400
        %863 = vmatpush1.bf16.msra.mxu0 %v399
        %864 = vmatprep.subr.bf16.mxu0 %v404
        %865 = vmatpush1.bf16.msra.mxu0 %v403
        %866 = vmatprep.subr.bf16.mxu0 %v408
        %867 = vmatpush1.bf16.msra.mxu0 %v407
        %868 = vmatprep.subr.bf16.mxu0 %v412
        %869 = vmatpush1.bf16.msra.mxu0 %v411
        %870 = vmatprep.subr.bf16.mxu0 %v416
        %871 = vmatpush1.bf16.msra.mxu0 %v415
        %872 = vmatprep.subr.bf16.mxu0 %v420
        %873 = vmatpush1.bf16.msra.mxu0 %v419
        %874 = vmatprep.subr.bf16.mxu0 %v424
        %875 = vmatpush1.bf16.msra.mxu0 %v423
        %876 = vmatprep.subr.bf16.mxu0 %v428
        %877 = vmatpush1.bf16.msra.mxu0 %v427
        %878 = vmatprep.subr.bf16.mxu0 0
        %879 = vmatpush1.bf16.msra.mxu0 0
        %880 = vmatprep.subr.bf16.mxu0 0
        %881 = vmatpush1.bf16.msra.mxu0 0
        %882 = vmatprep.subr.bf16.mxu0 0
        %883 = vmatpush1.bf16.msra.mxu0 0
        %884 = vmatprep.subr.bf16.mxu0 0
        %885 = vmatpush1.bf16.msra.mxu0 0
        %886 = vmatprep.subr.bf16.mxu0 0
        %887 = vmatpush1.bf16.msra.mxu0 0
        %888 = vmatprep.subr.bf16.mxu0 0
        %889 = vmatpush1.bf16.msra.mxu0 0
        %890 = vmatprep.subr.bf16.mxu0 0
        %891 = vmatpush1.bf16.msra.mxu0 0
        %892 = vmatprep.subr.bf16.mxu0 0
        %893 = vmatpush1.bf16.msra.mxu0 0
        %894 = vmatprep.mubr.bf16.mxu0 0
        %895 = vmatmul.mubr.bf16.gmra.mrb[0].mxu0 %v860
        %v896 = vpop.f32.mrb[0].mxu0
        %v897 = vadd.f32 0.0, %v896
        %v898 = vpop.f32.mrb[0].mxu0
        %v899 = vadd.f32 0.0, %v898
        %v900 = vpop.f32.mrb[0].mxu0
        %v901 = vadd.f32 0.0, %v900
        %v902 = vpop.f32.mrb[0].mxu0
        %v903 = vadd.f32 0.0, %v902
        %904 = vmatprep.mubr.bf16.mxu0 0
        %905 = vmatmul.mubr.bf16.gmra.mrb[0].mxu0 %v861
        %v906 = vpop.f32.mrb[0].mxu0
        %v907 = vpop.f32.mrb[0].mxu0
        %v908 = vpop.f32.mrb[0].mxu0
        %v909 = vpop.f32.mrb[0].mxu0
        %910 = vdwg.mxu0
        %911 = vmatprep.subr.bf16.mxu0 %v402
        %912 = vmatpush1.bf16.msra.mxu0 %v401
        %913 = vmatprep.subr.bf16.mxu0 %v406
        %914 = vmatpush1.bf16.msra.mxu0 %v405
        %915 = vmatprep.subr.bf16.mxu0 %v410
        %916 = vmatpush1.bf16.msra.mxu0 %v409
        %917 = vmatprep.subr.bf16.mxu0 %v414
        %918 = vmatpush1.bf16.msra.mxu0 %v413
        %919 = vmatprep.subr.bf16.mxu0 %v418
        %920 = vmatpush1.bf16.msra.mxu0 %v417
        %921 = vmatprep.subr.bf16.mxu0 %v422
        %922 = vmatpush1.bf16.msra.mxu0 %v421
        %923 = vmatprep.subr.bf16.mxu0 %v426
        %924 = vmatpush1.bf16.msra.mxu0 %v425
        %925 = vmatprep.subr.bf16.mxu0 %v430
        %926 = vmatpush1.bf16.msra.mxu0 %v429
        %927 = vmatprep.subr.bf16.mxu0 0
        %928 = vmatpush1.bf16.msra.mxu0 0
        %929 = vmatprep.subr.bf16.mxu0 0
        %930 = vmatpush1.bf16.msra.mxu0 0
        %931 = vmatprep.subr.bf16.mxu0 0
        %932 = vmatpush1.bf16.msra.mxu0 0
        %933 = vmatprep.subr.bf16.mxu0 0
        %934 = vmatpush1.bf16.msra.mxu0 0
        %935 = vmatprep.subr.bf16.mxu0 0
        %936 = vmatpush1.bf16.msra.mxu0 0
        %937 = vmatprep.subr.bf16.mxu0 0
        %938 = vmatpush1.bf16.msra.mxu0 0
        %939 = vmatprep.subr.bf16.mxu0 0
        %940 = vmatpush1.bf16.msra.mxu0 0
        %941 = vmatprep.subr.bf16.mxu0 0
        %942 = vmatpush1.bf16.msra.mxu0 0
        %943 = vmatprep.mubr.bf16.mxu0 0
        %944 = vmatmul.mubr.bf16.gmra.mrb[0].mxu0 %v860
        %v945 = vpop.f32.mrb[0].mxu0
        %v946 = vpop.f32.mrb[0].mxu0
        %v947 = vpop.f32.mrb[0].mxu0
        %v948 = vpop.f32.mrb[0].mxu0
        %949 = vmatprep.mubr.bf16.mxu0 0
        %950 = vmatmul.mubr.bf16.gmra.mrb[0].mxu0 %v861
        %v951 = vpop.f32.mrb[0].mxu0
        %v952 = vadd.f32 0.0, %v951
        %v953 = vpop.f32.mrb[0].mxu0
        %v954 = vadd.f32 0.0, %v953
        %v955 = vpop.f32.mrb[0].mxu0
        %v956 = vadd.f32 0.0, %v955
        %v957 = vpop.f32.mrb[0].mxu0
        %v958 = vadd.f32 0.0, %v957
        %959 = vdwg.mxu0
        %v960 = vmul.f32 %v899, %v952
        %v961 = vmul.f32 %v903, %v956
        %v962 = vmul.f32 %v954, %v897
        %v963 = vmul.f32 %v958, %v901
        %v964 = vsub.f32 %v960, %v962
        %v965 = vsub.f32 %v961, %v963
        %966 = vadd.xlane.f32.xlu0 %v964
        %v967 = vpop.xlane.xlu0 %966
        %968 = vadd.xlane.f32.xlu0 %v965
        %v969 = vpop.xlane.xlu0 %968
        %v972 = vlaneseq
        %v973 = vshrl.u32 %v972, 7
        %v974 = vsub.s32 %v574, %v973
        %v975 = vrot.slane %v967, %v974
        %v976 = vlaneseq
        %v977 = vshrl.u32 %v976, 7
        %v978 = vsub.s32 %v579, %v977
        %v979 = vrot.slane %v969, %v978
        %v980 = vsel %vm584, %v979, %v975
        %982 = vst.msk [vmem:[%s166 + $0x2] sm:$0x1] %vm587, %v980
        %s983 = scalar_lea.vmem %s172, 72
        %v984 = vld [vmem:[%s983] sm:$0xf]
        %v985 = vld [vmem:[%s983 + $0x4] sm:$0xf]
        %v986 = vld [vmem:[%s983 + $0x8] sm:$0xf]
        %v987 = vld [vmem:[%s983 + $0xc] sm:$0xf]
        %v988 = vld [vmem:[%s983 + $0x10] sm:$0xf]
        %v989 = vld [vmem:[%s983 + $0x14] sm:$0xf]
        %v996 = vunpack.c.l.b16 %v984
        %v997 = vunpack.c.l.b16 %v985
        %v998 = vunpack.c.l.b16 %v986
        %v999 = vunpack.c.l.b16 %v987
        %v1000 = vunpack.c.l.b16 %v988
        %v1001 = vunpack.c.l.b16 %v989
        %v1002 = vpack.c.b16 %v997, %v996
        %v1003 = vpack.c.b16 %v999, %v998
        %v1004 = vpack.c.b16 %v1001, %v1000
        %1008 = vmatprep.subr.bf16.mxu0 0
        %1009 = vmatpush1.bf16.msra.mxu0 %v1002
        %1010 = vmatprep.subr.bf16.mxu0 0
        %1011 = vmatpush1.bf16.msra.mxu0 %v1003
        %1012 = vmatprep.subr.bf16.mxu0 0
        %1013 = vmatpush1.bf16.msra.mxu0 %v1004
        %1014 = vmatprep.subr.bf16.mxu0 0
        %1015 = vmatpush1.bf16.msra.mxu0 0
        %1016 = vmatprep.subr.bf16.mxu0 0
        %1017 = vmatpush1.bf16.msra.mxu0 0
        %1018 = vmatprep.subr.bf16.mxu0 0
        %1019 = vmatpush1.bf16.msra.mxu0 0
        %1020 = vmatprep.subr.bf16.mxu0 0
        %1021 = vmatpush1.bf16.msra.mxu0 0
        %1022 = vmatprep.subr.bf16.mxu0 0
        %1023 = vmatpush1.bf16.msra.mxu0 0
        %1024 = vmatprep.subr.bf16.mxu0 0
        %1025 = vmatpush1.bf16.msra.mxu0 0
        %1026 = vmatprep.subr.bf16.mxu0 0
        %1027 = vmatpush1.bf16.msra.mxu0 0
        %1028 = vmatprep.subr.bf16.mxu0 0
        %1029 = vmatpush1.bf16.msra.mxu0 0
        %1030 = vmatprep.subr.bf16.mxu0 0
        %1031 = vmatpush1.bf16.msra.mxu0 0
        %1032 = vmatprep.subr.bf16.mxu0 0
        %1033 = vmatpush1.bf16.msra.mxu0 0
        %1034 = vmatprep.subr.bf16.mxu0 0
        %1035 = vmatpush1.bf16.msra.mxu0 0
        %1036 = vmatprep.subr.bf16.mxu0 0
        %1037 = vmatpush1.bf16.msra.mxu0 0
        %1038 = vmatprep.subr.bf16.mxu0 0
        %1039 = vmatpush1.bf16.msra.mxu0 0
        %1040 = vmatprep.mubr.bf16.mxu0 0
        %1041 = vmatmul.mubr.bf16.gmra.mrb[0].mxu0 %v247
        %v1042 = vpop.f32.mrb[0].mxu0
        %v1043 = vadd.f32 0.0, %v1042
        %v1044 = vpop.f32.mrb[0].mxu0
        %v1045 = vpop.f32.mrb[0].mxu0
        %v1046 = vadd.f32 0.0, %v1045
        %v1047 = vpop.f32.mrb[0].mxu0
        %1048 = vmatprep.mubr.bf16.mxu0 0
        %1049 = vmatmul.mubr.bf16.gmra.mrb[0].mxu0 %v250
        %v1050 = vpop.f32.mrb[0].mxu0
        %v1051 = vadd.f32 0.0, %v1050
        %v1052 = vpop.f32.mrb[0].mxu0
        %v1053 = vpop.f32.mrb[0].mxu0
        %v1054 = vadd.f32 0.0, %v1053
        %v1055 = vpop.f32.mrb[0].mxu0
        %1056 = vdwg.mxu0
        %v1057 = vpack.c.bf16 %v1046, %v1043
        %v1058 = vpack.c.bf16 %v1054, %v1051
        %1059 = vmatprep.subr.bf16.mxu0 %v400
        %1060 = vmatpush1.bf16.msra.mxu0 %v399
        %1061 = vmatprep.subr.bf16.mxu0 %v404
        %1062 = vmatpush1.bf16.msra.mxu0 %v403
        %1063 = vmatprep.subr.bf16.mxu0 %v408
        %1064 = vmatpush1.bf16.msra.mxu0 %v407
        %1065 = vmatprep.subr.bf16.mxu0 %v412
        %1066 = vmatpush1.bf16.msra.mxu0 %v411
        %1067 = vmatprep.subr.bf16.mxu0 %v416
        %1068 = vmatpush1.bf16.msra.mxu0 %v415
        %1069 = vmatprep.subr.bf16.mxu0 %v420
        %1070 = vmatpush1.bf16.msra.mxu0 %v419
        %1071 = vmatprep.subr.bf16.mxu0 %v424
        %1072 = vmatpush1.bf16.msra.mxu0 %v423
        %1073 = vmatprep.subr.bf16.mxu0 %v428
        %1074 = vmatpush1.bf16.msra.mxu0 %v427
        %1075 = vmatprep.subr.bf16.mxu0 0
        %1076 = vmatpush1.bf16.msra.mxu0 0
        %1077 = vmatprep.subr.bf16.mxu0 0
        %1078 = vmatpush1.bf16.msra.mxu0 0
        %1079 = vmatprep.subr.bf16.mxu0 0
        %1080 = vmatpush1.bf16.msra.mxu0 0
        %1081 = vmatprep.subr.bf16.mxu0 0
        %1082 = vmatpush1.bf16.msra.mxu0 0
        %1083 = vmatprep.subr.bf16.mxu0 0
        %1084 = vmatpush1.bf16.msra.mxu0 0
        %1085 = vmatprep.subr.bf16.mxu0 0
        %1086 = vmatpush1.bf16.msra.mxu0 0
        %1087 = vmatprep.subr.bf16.mxu0 0
        %1088 = vmatpush1.bf16.msra.mxu0 0
        %1089 = vmatprep.subr.bf16.mxu0 0
        %1090 = vmatpush1.bf16.msra.mxu0 0
        %1091 = vmatprep.mubr.bf16.mxu0 0
        %1092 = vmatmul.mubr.bf16.gmra.mrb[0].mxu0 %v1057
        %v1093 = vpop.f32.mrb[0].mxu0
        %v1094 = vadd.f32 0.0, %v1093
        %v1095 = vpop.f32.mrb[0].mxu0
        %v1096 = vadd.f32 0.0, %v1095
        %v1097 = vpop.f32.mrb[0].mxu0
        %v1098 = vadd.f32 0.0, %v1097
        %v1099 = vpop.f32.mrb[0].mxu0
        %v1100 = vadd.f32 0.0, %v1099
        %1101 = vmatprep.mubr.bf16.mxu0 0
        %1102 = vmatmul.mubr.bf16.gmra.mrb[0].mxu0 %v1058
        %v1103 = vpop.f32.mrb[0].mxu0
        %v1104 = vpop.f32.mrb[0].mxu0
        %v1105 = vpop.f32.mrb[0].mxu0
        %v1106 = vpop.f32.mrb[0].mxu0
        %1107 = vdwg.mxu0
        %1108 = vmatprep.subr.bf16.mxu0 %v402
        %1109 = vmatpush1.bf16.msra.mxu0 %v401
        %1110 = vmatprep.subr.bf16.mxu0 %v406
        %1111 = vmatpush1.bf16.msra.mxu0 %v405
        %1112 = vmatprep.subr.bf16.mxu0 %v410
        %1113 = vmatpush1.bf16.msra.mxu0 %v409
        %1114 = vmatprep.subr.bf16.mxu0 %v414
        %1115 = vmatpush1.bf16.msra.mxu0 %v413
        %1116 = vmatprep.subr.bf16.mxu0 %v418
        %1117 = vmatpush1.bf16.msra.mxu0 %v417
        %1118 = vmatprep.subr.bf16.mxu0 %v422
        %1119 = vmatpush1.bf16.msra.mxu0 %v421
        %1120 = vmatprep.subr.bf16.mxu0 %v426
        %1121 = vmatpush1.bf16.msra.mxu0 %v425
        %1122 = vmatprep.subr.bf16.mxu0 %v430
        %1123 = vmatpush1.bf16.msra.mxu0 %v429
        %1124 = vmatprep.subr.bf16.mxu0 0
        %1125 = vmatpush1.bf16.msra.mxu0 0
        %1126 = vmatprep.subr.bf16.mxu0 0
        %1127 = vmatpush1.bf16.msra.mxu0 0
        %1128 = vmatprep.subr.bf16.mxu0 0
        %1129 = vmatpush1.bf16.msra.mxu0 0
        %1130 = vmatprep.subr.bf16.mxu0 0
        %1131 = vmatpush1.bf16.msra.mxu0 0
        %1132 = vmatprep.subr.bf16.mxu0 0
        %1133 = vmatpush1.bf16.msra.mxu0 0
        %1134 = vmatprep.subr.bf16.mxu0 0
        %1135 = vmatpush1.bf16.msra.mxu0 0
        %1136 = vmatprep.subr.bf16.mxu0 0
        %1137 = vmatpush1.bf16.msra.mxu0 0
        %1138 = vmatprep.subr.bf16.mxu0 0
        %1139 = vmatpush1.bf16.msra.mxu0 0
        %1140 = vmatprep.mubr.bf16.mxu0 0
        %1141 = vmatmul.mubr.bf16.gmra.mrb[0].mxu0 %v1057
        %v1142 = vpop.f32.mrb[0].mxu0
        %v1143 = vpop.f32.mrb[0].mxu0
        %v1144 = vpop.f32.mrb[0].mxu0
        %v1145 = vpop.f32.mrb[0].mxu0
        %1146 = vmatprep.mubr.bf16.mxu0 0
        %1147 = vmatmul.mubr.bf16.gmra.mrb[0].mxu0 %v1058
        %v1148 = vpop.f32.mrb[0].mxu0
        %v1149 = vadd.f32 0.0, %v1148
        %v1150 = vpop.f32.mrb[0].mxu0
        %v1151 = vadd.f32 0.0, %v1150
        %v1152 = vpop.f32.mrb[0].mxu0
        %v1153 = vadd.f32 0.0, %v1152
        %v1154 = vpop.f32.mrb[0].mxu0
        %v1155 = vadd.f32 0.0, %v1154
        %1156 = vdwg.mxu0
        %v1157 = vmul.f32 %v1096, %v1149
        %v1158 = vmul.f32 %v1100, %v1153
        %v1159 = vmul.f32 %v1151, %v1094
        %v1160 = vmul.f32 %v1155, %v1098
        %v1161 = vsub.f32 %v1157, %v1159
        %v1162 = vsub.f32 %v1158, %v1160
        %1163 = vadd.xlane.f32.xlu0 %v1161
        %v1164 = vpop.xlane.xlu0 %1163
        %1165 = vadd.xlane.f32.xlu0 %v1162
        %v1166 = vpop.xlane.xlu0 %1165
        %v1169 = vlaneseq
        %v1170 = vshrl.u32 %v1169, 7
        %v1171 = vsub.s32 %v574, %v1170
        %v1172 = vrot.slane %v1164, %v1171
        %v1173 = vlaneseq
        %v1174 = vshrl.u32 %v1173, 7
        %v1175 = vsub.s32 %v579, %v1174
        %v1176 = vrot.slane %v1166, %v1175
        %v1177 = vsel %vm584, %v1176, %v1172
        %1179 = vst.msk [vmem:[%s166 + $0x3] sm:$0x1] %vm587, %v1177
        %s1180 = scalar_lea.vmem %s172, 96
        %v1181 = vld [vmem:[%s1180] sm:$0xf]
        %v1182 = vld [vmem:[%s1180 + $0x4] sm:$0xf]
        %v1183 = vld [vmem:[%s1180 + $0x8] sm:$0xf]
        %v1184 = vld [vmem:[%s1180 + $0xc] sm:$0xf]
        %v1185 = vld [vmem:[%s1180 + $0x10] sm:$0xf]
        %v1186 = vld [vmem:[%s1180 + $0x14] sm:$0xf]
        %v1193 = vunpack.c.l.b16 %v1181
        %v1194 = vunpack.c.l.b16 %v1182
        %v1195 = vunpack.c.l.b16 %v1183
        %v1196 = vunpack.c.l.b16 %v1184
        %v1197 = vunpack.c.l.b16 %v1185
        %v1198 = vunpack.c.l.b16 %v1186
        %v1199 = vpack.c.b16 %v1194, %v1193
        %v1200 = vpack.c.b16 %v1196, %v1195
        %v1201 = vpack.c.b16 %v1198, %v1197
        %1205 = vmatprep.subr.bf16.mxu0 0
        %1206 = vmatpush1.bf16.msra.mxu0 %v1199
        %1207 = vmatprep.subr.bf16.mxu0 0
        %1208 = vmatpush1.bf16.msra.mxu0 %v1200
        %1209 = vmatprep.subr.bf16.mxu0 0
        %1210 = vmatpush1.bf16.msra.mxu0 %v1201
        %1211 = vmatprep.subr.bf16.mxu0 0
        %1212 = vmatpush1.bf16.msra.mxu0 0
        %1213 = vmatprep.subr.bf16.mxu0 0
        %1214 = vmatpush1.bf16.msra.mxu0 0
        %1215 = vmatprep.subr.bf16.mxu0 0
        %1216 = vmatpush1.bf16.msra.mxu0 0
        %1217 = vmatprep.subr.bf16.mxu0 0
        %1218 = vmatpush1.bf16.msra.mxu0 0
        %1219 = vmatprep.subr.bf16.mxu0 0
        %1220 = vmatpush1.bf16.msra.mxu0 0
        %1221 = vmatprep.subr.bf16.mxu0 0
        %1222 = vmatpush1.bf16.msra.mxu0 0
        %1223 = vmatprep.subr.bf16.mxu0 0
        %1224 = vmatpush1.bf16.msra.mxu0 0
        %1225 = vmatprep.subr.bf16.mxu0 0
        %1226 = vmatpush1.bf16.msra.mxu0 0
        %1227 = vmatprep.subr.bf16.mxu0 0
        %1228 = vmatpush1.bf16.msra.mxu0 0
        %1229 = vmatprep.subr.bf16.mxu0 0
        %1230 = vmatpush1.bf16.msra.mxu0 0
        %1231 = vmatprep.subr.bf16.mxu0 0
        %1232 = vmatpush1.bf16.msra.mxu0 0
        %1233 = vmatprep.subr.bf16.mxu0 0
        %1234 = vmatpush1.bf16.msra.mxu0 0
        %1235 = vmatprep.subr.bf16.mxu0 0
        %1236 = vmatpush1.bf16.msra.mxu0 0
        %1237 = vmatprep.mubr.bf16.mxu0 0
        %1238 = vmatmul.mubr.bf16.gmra.mrb[0].mxu0 %v247
        %v1239 = vpop.f32.mrb[0].mxu0
        %v1240 = vadd.f32 0.0, %v1239
        %v1241 = vpop.f32.mrb[0].mxu0
        %v1242 = vpop.f32.mrb[0].mxu0
        %v1243 = vadd.f32 0.0, %v1242
        %v1244 = vpop.f32.mrb[0].mxu0
        %1245 = vmatprep.mubr.bf16.mxu0 0
        %1246 = vmatmul.mubr.bf16.gmra.mrb[0].mxu0 %v250
        %v1247 = vpop.f32.mrb[0].mxu0
        %v1248 = vadd.f32 0.0, %v1247
        %v1249 = vpop.f32.mrb[0].mxu0
        %v1250 = vpop.f32.mrb[0].mxu0
        %v1251 = vadd.f32 0.0, %v1250
        %v1252 = vpop.f32.mrb[0].mxu0
        %1253 = vdwg.mxu0
        %v1254 = vpack.c.bf16 %v1243, %v1240
        %v1255 = vpack.c.bf16 %v1251, %v1248
        %1256 = vmatprep.subr.bf16.mxu0 %v400
        %1257 = vmatpush1.bf16.msra.mxu0 %v399
        %1258 = vmatprep.subr.bf16.mxu0 %v404
        %1259 = vmatpush1.bf16.msra.mxu0 %v403
        %1260 = vmatprep.subr.bf16.mxu0 %v408
        %1261 = vmatpush1.bf16.msra.mxu0 %v407
        %1262 = vmatprep.subr.bf16.mxu0 %v412
        %1263 = vmatpush1.bf16.msra.mxu0 %v411
        %1264 = vmatprep.subr.bf16.mxu0 %v416
        %1265 = vmatpush1.bf16.msra.mxu0 %v415
        %1266 = vmatprep.subr.bf16.mxu0 %v420
        %1267 = vmatpush1.bf16.msra.mxu0 %v419
        %1268 = vmatprep.subr.bf16.mxu0 %v424
        %1269 = vmatpush1.bf16.msra.mxu0 %v423
        %1270 = vmatprep.subr.bf16.mxu0 %v428
        %1271 = vmatpush1.bf16.msra.mxu0 %v427
        %1272 = vmatprep.subr.bf16.mxu0 0
        %1273 = vmatpush1.bf16.msra.mxu0 0
        %1274 = vmatprep.subr.bf16.mxu0 0
        %1275 = vmatpush1.bf16.msra.mxu0 0
        %1276 = vmatprep.subr.bf16.mxu0 0
        %1277 = vmatpush1.bf16.msra.mxu0 0
        %1278 = vmatprep.subr.bf16.mxu0 0
        %1279 = vmatpush1.bf16.msra.mxu0 0
        %1280 = vmatprep.subr.bf16.mxu0 0
        %1281 = vmatpush1.bf16.msra.mxu0 0
        %1282 = vmatprep.subr.bf16.mxu0 0
        %1283 = vmatpush1.bf16.msra.mxu0 0
        %1284 = vmatprep.subr.bf16.mxu0 0
        %1285 = vmatpush1.bf16.msra.mxu0 0
        %1286 = vmatprep.subr.bf16.mxu0 0
        %1287 = vmatpush1.bf16.msra.mxu0 0
        %1288 = vmatprep.mubr.bf16.mxu0 0
        %1289 = vmatmul.mubr.bf16.gmra.mrb[0].mxu0 %v1254
        %v1290 = vpop.f32.mrb[0].mxu0
        %v1291 = vadd.f32 0.0, %v1290
        %v1292 = vpop.f32.mrb[0].mxu0
        %v1293 = vadd.f32 0.0, %v1292
        %v1294 = vpop.f32.mrb[0].mxu0
        %v1295 = vadd.f32 0.0, %v1294
        %v1296 = vpop.f32.mrb[0].mxu0
        %v1297 = vadd.f32 0.0, %v1296
        %1298 = vmatprep.mubr.bf16.mxu0 0
        %1299 = vmatmul.mubr.bf16.gmra.mrb[0].mxu0 %v1255
        %v1300 = vpop.f32.mrb[0].mxu0
        %v1301 = vpop.f32.mrb[0].mxu0
        %v1302 = vpop.f32.mrb[0].mxu0
        %v1303 = vpop.f32.mrb[0].mxu0
        %1304 = vdwg.mxu0
        %1305 = vmatprep.subr.bf16.mxu0 %v402
        %1306 = vmatpush1.bf16.msra.mxu0 %v401
        %1307 = vmatprep.subr.bf16.mxu0 %v406
        %1308 = vmatpush1.bf16.msra.mxu0 %v405
        %1309 = vmatprep.subr.bf16.mxu0 %v410
        %1310 = vmatpush1.bf16.msra.mxu0 %v409
        %1311 = vmatprep.subr.bf16.mxu0 %v414
        %1312 = vmatpush1.bf16.msra.mxu0 %v413
        %1313 = vmatprep.subr.bf16.mxu0 %v418
        %1314 = vmatpush1.bf16.msra.mxu0 %v417
        %1315 = vmatprep.subr.bf16.mxu0 %v422
        %1316 = vmatpush1.bf16.msra.mxu0 %v421
        %1317 = vmatprep.subr.bf16.mxu0 %v426
        %1318 = vmatpush1.bf16.msra.mxu0 %v425
        %1319 = vmatprep.subr.bf16.mxu0 %v430
        %1320 = vmatpush1.bf16.msra.mxu0 %v429
        %1321 = vmatprep.subr.bf16.mxu0 0
        %1322 = vmatpush1.bf16.msra.mxu0 0
        %1323 = vmatprep.subr.bf16.mxu0 0
        %1324 = vmatpush1.bf16.msra.mxu0 0
        %1325 = vmatprep.subr.bf16.mxu0 0
        %1326 = vmatpush1.bf16.msra.mxu0 0
        %1327 = vmatprep.subr.bf16.mxu0 0
        %1328 = vmatpush1.bf16.msra.mxu0 0
        %1329 = vmatprep.subr.bf16.mxu0 0
        %1330 = vmatpush1.bf16.msra.mxu0 0
        %1331 = vmatprep.subr.bf16.mxu0 0
        %1332 = vmatpush1.bf16.msra.mxu0 0
        %1333 = vmatprep.subr.bf16.mxu0 0
        %1334 = vmatpush1.bf16.msra.mxu0 0
        %1335 = vmatprep.subr.bf16.mxu0 0
        %1336 = vmatpush1.bf16.msra.mxu0 0
        %1337 = vmatprep.mubr.bf16.mxu0 0
        %1338 = vmatmul.mubr.bf16.gmra.mrb[0].mxu0 %v1254
        %v1339 = vpop.f32.mrb[0].mxu0
        %v1340 = vpop.f32.mrb[0].mxu0
        %v1341 = vpop.f32.mrb[0].mxu0
        %v1342 = vpop.f32.mrb[0].mxu0
        %1343 = vmatprep.mubr.bf16.mxu0 0
        %1344 = vmatmul.mubr.bf16.gmra.mrb[0].mxu0 %v1255
        %v1345 = vpop.f32.mrb[0].mxu0
        %v1346 = vadd.f32 0.0, %v1345
        %v1347 = vpop.f32.mrb[0].mxu0
        %v1348 = vadd.f32 0.0, %v1347
        %v1349 = vpop.f32.mrb[0].mxu0
        %v1350 = vadd.f32 0.0, %v1349
        %v1351 = vpop.f32.mrb[0].mxu0
        %v1352 = vadd.f32 0.0, %v1351
        %1353 = vdwg.mxu0
        %v1354 = vmul.f32 %v1293, %v1346
        %v1355 = vmul.f32 %v1297, %v1350
        %v1356 = vmul.f32 %v1348, %v1291
        %v1357 = vmul.f32 %v1352, %v1295
        %v1358 = vsub.f32 %v1354, %v1356
        %v1359 = vsub.f32 %v1355, %v1357
        %1360 = vadd.xlane.f32.xlu0 %v1358
        %v1361 = vpop.xlane.xlu0 %1360
        %1362 = vadd.xlane.f32.xlu0 %v1359
        %v1363 = vpop.xlane.xlu0 %1362
        %v1366 = vlaneseq
        %v1367 = vshrl.u32 %v1366, 7
        %v1368 = vsub.s32 %v574, %v1367
        %v1369 = vrot.slane %v1361, %v1368
        %v1370 = vlaneseq
        %v1371 = vshrl.u32 %v1370, 7
        %v1372 = vsub.s32 %v579, %v1371
        %v1373 = vrot.slane %v1363, %v1372
        %v1374 = vsel %vm584, %v1373, %v1369
        %1376 = vst.msk [vmem:[%s166 + $0x4] sm:$0x1] %vm587, %v1374
        %s1377 = scalar_lea.vmem %s172, 120
        %v1378 = vld [vmem:[%s1377] sm:$0xf]
        %v1379 = vld [vmem:[%s1377 + $0x4] sm:$0xf]
        %v1380 = vld [vmem:[%s1377 + $0x8] sm:$0xf]
        %v1381 = vld [vmem:[%s1377 + $0xc] sm:$0xf]
        %v1382 = vld [vmem:[%s1377 + $0x10] sm:$0xf]
        %v1383 = vld [vmem:[%s1377 + $0x14] sm:$0xf]
        %v1390 = vunpack.c.l.b16 %v1378
        %v1391 = vunpack.c.l.b16 %v1379
        %v1392 = vunpack.c.l.b16 %v1380
        %v1393 = vunpack.c.l.b16 %v1381
        %v1394 = vunpack.c.l.b16 %v1382
        %v1395 = vunpack.c.l.b16 %v1383
        %v1396 = vpack.c.b16 %v1391, %v1390
        %v1397 = vpack.c.b16 %v1393, %v1392
        %v1398 = vpack.c.b16 %v1395, %v1394
        %1402 = vmatprep.subr.bf16.mxu0 0
        %1403 = vmatpush1.bf16.msra.mxu0 %v1396
        %1404 = vmatprep.subr.bf16.mxu0 0
        %1405 = vmatpush1.bf16.msra.mxu0 %v1397
        %1406 = vmatprep.subr.bf16.mxu0 0
        %1407 = vmatpush1.bf16.msra.mxu0 %v1398
        %1408 = vmatprep.subr.bf16.mxu0 0
        %1409 = vmatpush1.bf16.msra.mxu0 0
        %1410 = vmatprep.subr.bf16.mxu0 0
        %1411 = vmatpush1.bf16.msra.mxu0 0
        %1412 = vmatprep.subr.bf16.mxu0 0
        %1413 = vmatpush1.bf16.msra.mxu0 0
        %1414 = vmatprep.subr.bf16.mxu0 0
        %1415 = vmatpush1.bf16.msra.mxu0 0
        %1416 = vmatprep.subr.bf16.mxu0 0
        %1417 = vmatpush1.bf16.msra.mxu0 0
        %1418 = vmatprep.subr.bf16.mxu0 0
        %1419 = vmatpush1.bf16.msra.mxu0 0
        %1420 = vmatprep.subr.bf16.mxu0 0
        %1421 = vmatpush1.bf16.msra.mxu0 0
        %1422 = vmatprep.subr.bf16.mxu0 0
        %1423 = vmatpush1.bf16.msra.mxu0 0
        %1424 = vmatprep.subr.bf16.mxu0 0
        %1425 = vmatpush1.bf16.msra.mxu0 0
        %1426 = vmatprep.subr.bf16.mxu0 0
        %1427 = vmatpush1.bf16.msra.mxu0 0
        %1428 = vmatprep.subr.bf16.mxu0 0
        %1429 = vmatpush1.bf16.msra.mxu0 0
        %1430 = vmatprep.subr.bf16.mxu0 0
        %1431 = vmatpush1.bf16.msra.mxu0 0
        %1432 = vmatprep.subr.bf16.mxu0 0
        %1433 = vmatpush1.bf16.msra.mxu0 0
        %1434 = vmatprep.mubr.bf16.mxu0 0
        %1435 = vmatmul.mubr.bf16.gmra.mrb[0].mxu0 %v247
        %v1436 = vpop.f32.mrb[0].mxu0
        %v1437 = vadd.f32 0.0, %v1436
        %v1438 = vpop.f32.mrb[0].mxu0
        %v1439 = vpop.f32.mrb[0].mxu0
        %v1440 = vadd.f32 0.0, %v1439
        %v1441 = vpop.f32.mrb[0].mxu0
        %1442 = vmatprep.mubr.bf16.mxu0 0
        %1443 = vmatmul.mubr.bf16.gmra.mrb[0].mxu0 %v250
        %v1444 = vpop.f32.mrb[0].mxu0
        %v1445 = vadd.f32 0.0, %v1444
        %v1446 = vpop.f32.mrb[0].mxu0
        %v1447 = vpop.f32.mrb[0].mxu0
        %v1448 = vadd.f32 0.0, %v1447
        %v1449 = vpop.f32.mrb[0].mxu0
        %1450 = vdwg.mxu0
        %v1451 = vpack.c.bf16 %v1440, %v1437
        %v1452 = vpack.c.bf16 %v1448, %v1445
        %1453 = vmatprep.subr.bf16.mxu0 %v400
        %1454 = vmatpush1.bf16.msra.mxu0 %v399
        %1455 = vmatprep.subr.bf16.mxu0 %v404
        %1456 = vmatpush1.bf16.msra.mxu0 %v403
        %1457 = vmatprep.subr.bf16.mxu0 %v408
        %1458 = vmatpush1.bf16.msra.mxu0 %v407
        %1459 = vmatprep.subr.bf16.mxu0 %v412
        %1460 = vmatpush1.bf16.msra.mxu0 %v411
        %1461 = vmatprep.subr.bf16.mxu0 %v416
        %1462 = vmatpush1.bf16.msra.mxu0 %v415
        %1463 = vmatprep.subr.bf16.mxu0 %v420
        %1464 = vmatpush1.bf16.msra.mxu0 %v419
        %1465 = vmatprep.subr.bf16.mxu0 %v424
        %1466 = vmatpush1.bf16.msra.mxu0 %v423
        %1467 = vmatprep.subr.bf16.mxu0 %v428
        %1468 = vmatpush1.bf16.msra.mxu0 %v427
        %1469 = vmatprep.subr.bf16.mxu0 0
        %1470 = vmatpush1.bf16.msra.mxu0 0
        %1471 = vmatprep.subr.bf16.mxu0 0
        %1472 = vmatpush1.bf16.msra.mxu0 0
        %1473 = vmatprep.subr.bf16.mxu0 0
        %1474 = vmatpush1.bf16.msra.mxu0 0
        %1475 = vmatprep.subr.bf16.mxu0 0
        %1476 = vmatpush1.bf16.msra.mxu0 0
        %1477 = vmatprep.subr.bf16.mxu0 0
        %1478 = vmatpush1.bf16.msra.mxu0 0
        %1479 = vmatprep.subr.bf16.mxu0 0
        %1480 = vmatpush1.bf16.msra.mxu0 0
        %1481 = vmatprep.subr.bf16.mxu0 0
        %1482 = vmatpush1.bf16.msra.mxu0 0
        %1483 = vmatprep.subr.bf16.mxu0 0
        %1484 = vmatpush1.bf16.msra.mxu0 0
        %1485 = vmatprep.mubr.bf16.mxu0 0
        %1486 = vmatmul.mubr.bf16.gmra.mrb[0].mxu0 %v1451
        %v1487 = vpop.f32.mrb[0].mxu0
        %v1488 = vadd.f32 0.0, %v1487
        %v1489 = vpop.f32.mrb[0].mxu0
        %v1490 = vadd.f32 0.0, %v1489
        %v1491 = vpop.f32.mrb[0].mxu0
        %v1492 = vadd.f32 0.0, %v1491
        %v1493 = vpop.f32.mrb[0].mxu0
        %v1494 = vadd.f32 0.0, %v1493
        %1495 = vmatprep.mubr.bf16.mxu0 0
        %1496 = vmatmul.mubr.bf16.gmra.mrb[0].mxu0 %v1452
        %v1497 = vpop.f32.mrb[0].mxu0
        %v1498 = vpop.f32.mrb[0].mxu0
        %v1499 = vpop.f32.mrb[0].mxu0
        %v1500 = vpop.f32.mrb[0].mxu0
        %1501 = vdwg.mxu0
        %1502 = vmatprep.subr.bf16.mxu0 %v402
        %1503 = vmatpush1.bf16.msra.mxu0 %v401
        %1504 = vmatprep.subr.bf16.mxu0 %v406
        %1505 = vmatpush1.bf16.msra.mxu0 %v405
        %1506 = vmatprep.subr.bf16.mxu0 %v410
        %1507 = vmatpush1.bf16.msra.mxu0 %v409
        %1508 = vmatprep.subr.bf16.mxu0 %v414
        %1509 = vmatpush1.bf16.msra.mxu0 %v413
        %1510 = vmatprep.subr.bf16.mxu0 %v418
        %1511 = vmatpush1.bf16.msra.mxu0 %v417
        %1512 = vmatprep.subr.bf16.mxu0 %v422
        %1513 = vmatpush1.bf16.msra.mxu0 %v421
        %1514 = vmatprep.subr.bf16.mxu0 %v426
        %1515 = vmatpush1.bf16.msra.mxu0 %v425
        %1516 = vmatprep.subr.bf16.mxu0 %v430
        %1517 = vmatpush1.bf16.msra.mxu0 %v429
        %1518 = vmatprep.subr.bf16.mxu0 0
        %1519 = vmatpush1.bf16.msra.mxu0 0
        %1520 = vmatprep.subr.bf16.mxu0 0
        %1521 = vmatpush1.bf16.msra.mxu0 0
        %1522 = vmatprep.subr.bf16.mxu0 0
        %1523 = vmatpush1.bf16.msra.mxu0 0
        %1524 = vmatprep.subr.bf16.mxu0 0
        %1525 = vmatpush1.bf16.msra.mxu0 0
        %1526 = vmatprep.subr.bf16.mxu0 0
        %1527 = vmatpush1.bf16.msra.mxu0 0
        %1528 = vmatprep.subr.bf16.mxu0 0
        %1529 = vmatpush1.bf16.msra.mxu0 0
        %1530 = vmatprep.subr.bf16.mxu0 0
        %1531 = vmatpush1.bf16.msra.mxu0 0
        %1532 = vmatprep.subr.bf16.mxu0 0
        %1533 = vmatpush1.bf16.msra.mxu0 0
        %1534 = vmatprep.mubr.bf16.mxu0 0
        %1535 = vmatmul.mubr.bf16.gmra.mrb[0].mxu0 %v1451
        %v1536 = vpop.f32.mrb[0].mxu0
        %v1537 = vpop.f32.mrb[0].mxu0
        %v1538 = vpop.f32.mrb[0].mxu0
        %v1539 = vpop.f32.mrb[0].mxu0
        %1540 = vmatprep.mubr.bf16.mxu0 0
        %1541 = vmatmul.mubr.bf16.gmra.mrb[0].mxu0 %v1452
        %v1542 = vpop.f32.mrb[0].mxu0
        %v1543 = vadd.f32 0.0, %v1542
        %v1544 = vpop.f32.mrb[0].mxu0
        %v1545 = vadd.f32 0.0, %v1544
        %v1546 = vpop.f32.mrb[0].mxu0
        %v1547 = vadd.f32 0.0, %v1546
        %v1548 = vpop.f32.mrb[0].mxu0
        %v1549 = vadd.f32 0.0, %v1548
        %1550 = vdwg.mxu0
        %v1551 = vmul.f32 %v1490, %v1543
        %v1552 = vmul.f32 %v1494, %v1547
        %v1553 = vmul.f32 %v1545, %v1488
        %v1554 = vmul.f32 %v1549, %v1492
        %v1555 = vsub.f32 %v1551, %v1553
        %v1556 = vsub.f32 %v1552, %v1554
        %1557 = vadd.xlane.f32.xlu0 %v1555
        %v1558 = vpop.xlane.xlu0 %1557
        %1559 = vadd.xlane.f32.xlu0 %v1556
        %v1560 = vpop.xlane.xlu0 %1559
        %v1563 = vlaneseq
        %v1564 = vshrl.u32 %v1563, 7
        %v1565 = vsub.s32 %v574, %v1564
        %v1566 = vrot.slane %v1558, %v1565
        %v1567 = vlaneseq
        %v1568 = vshrl.u32 %v1567, 7
        %v1569 = vsub.s32 %v579, %v1568
        %v1570 = vrot.slane %v1560, %v1569
        %v1571 = vsel %vm584, %v1570, %v1566
        %1573 = vst.msk [vmem:[%s166 + $0x5] sm:$0x1] %vm587, %v1571
        %s1574 = scalar_lea.vmem %s172, 144
        %v1575 = vld [vmem:[%s1574] sm:$0xf]
        %v1576 = vld [vmem:[%s1574 + $0x4] sm:$0xf]
        %v1577 = vld [vmem:[%s1574 + $0x8] sm:$0xf]
        %v1578 = vld [vmem:[%s1574 + $0xc] sm:$0xf]
        %v1579 = vld [vmem:[%s1574 + $0x10] sm:$0xf]
        %v1580 = vld [vmem:[%s1574 + $0x14] sm:$0xf]
        %v1587 = vunpack.c.l.b16 %v1575
        %v1588 = vunpack.c.l.b16 %v1576
        %v1589 = vunpack.c.l.b16 %v1577
        %v1590 = vunpack.c.l.b16 %v1578
        %v1591 = vunpack.c.l.b16 %v1579
        %v1592 = vunpack.c.l.b16 %v1580
        %v1593 = vpack.c.b16 %v1588, %v1587
        %v1594 = vpack.c.b16 %v1590, %v1589
        %v1595 = vpack.c.b16 %v1592, %v1591
        %1599 = vmatprep.subr.bf16.mxu0 0
        %1600 = vmatpush1.bf16.msra.mxu0 %v1593
        %1601 = vmatprep.subr.bf16.mxu0 0
        %1602 = vmatpush1.bf16.msra.mxu0 %v1594
        %1603 = vmatprep.subr.bf16.mxu0 0
        %1604 = vmatpush1.bf16.msra.mxu0 %v1595
        %1605 = vmatprep.subr.bf16.mxu0 0
        %1606 = vmatpush1.bf16.msra.mxu0 0
        %1607 = vmatprep.subr.bf16.mxu0 0
        %1608 = vmatpush1.bf16.msra.mxu0 0
        %1609 = vmatprep.subr.bf16.mxu0 0
        %1610 = vmatpush1.bf16.msra.mxu0 0
        %1611 = vmatprep.subr.bf16.mxu0 0
        %1612 = vmatpush1.bf16.msra.mxu0 0
        %1613 = vmatprep.subr.bf16.mxu0 0
        %1614 = vmatpush1.bf16.msra.mxu0 0
        %1615 = vmatprep.subr.bf16.mxu0 0
        %1616 = vmatpush1.bf16.msra.mxu0 0
        %1617 = vmatprep.subr.bf16.mxu0 0
        %1618 = vmatpush1.bf16.msra.mxu0 0
        %1619 = vmatprep.subr.bf16.mxu0 0
        %1620 = vmatpush1.bf16.msra.mxu0 0
        %1621 = vmatprep.subr.bf16.mxu0 0
        %1622 = vmatpush1.bf16.msra.mxu0 0
        %1623 = vmatprep.subr.bf16.mxu0 0
        %1624 = vmatpush1.bf16.msra.mxu0 0
        %1625 = vmatprep.subr.bf16.mxu0 0
        %1626 = vmatpush1.bf16.msra.mxu0 0
        %1627 = vmatprep.subr.bf16.mxu0 0
        %1628 = vmatpush1.bf16.msra.mxu0 0
        %1629 = vmatprep.subr.bf16.mxu0 0
        %1630 = vmatpush1.bf16.msra.mxu0 0
        %1631 = vmatprep.mubr.bf16.mxu0 0
        %1632 = vmatmul.mubr.bf16.gmra.mrb[0].mxu0 %v247
        %v1633 = vpop.f32.mrb[0].mxu0
        %v1634 = vadd.f32 0.0, %v1633
        %v1635 = vpop.f32.mrb[0].mxu0
        %v1636 = vpop.f32.mrb[0].mxu0
        %v1637 = vadd.f32 0.0, %v1636
        %v1638 = vpop.f32.mrb[0].mxu0
        %1639 = vmatprep.mubr.bf16.mxu0 0
        %1640 = vmatmul.mubr.bf16.gmra.mrb[0].mxu0 %v250
        %v1641 = vpop.f32.mrb[0].mxu0
        %v1642 = vadd.f32 0.0, %v1641
        %v1643 = vpop.f32.mrb[0].mxu0
        %v1644 = vpop.f32.mrb[0].mxu0
        %v1645 = vadd.f32 0.0, %v1644
        %v1646 = vpop.f32.mrb[0].mxu0
        %1647 = vdwg.mxu0
        %v1648 = vpack.c.bf16 %v1637, %v1634
        %v1649 = vpack.c.bf16 %v1645, %v1642
        %1650 = vmatprep.subr.bf16.mxu0 %v400
        %1651 = vmatpush1.bf16.msra.mxu0 %v399
        %1652 = vmatprep.subr.bf16.mxu0 %v404
        %1653 = vmatpush1.bf16.msra.mxu0 %v403
        %1654 = vmatprep.subr.bf16.mxu0 %v408
        %1655 = vmatpush1.bf16.msra.mxu0 %v407
        %1656 = vmatprep.subr.bf16.mxu0 %v412
        %1657 = vmatpush1.bf16.msra.mxu0 %v411
        %1658 = vmatprep.subr.bf16.mxu0 %v416
        %1659 = vmatpush1.bf16.msra.mxu0 %v415
        %1660 = vmatprep.subr.bf16.mxu0 %v420
        %1661 = vmatpush1.bf16.msra.mxu0 %v419
        %1662 = vmatprep.subr.bf16.mxu0 %v424
        %1663 = vmatpush1.bf16.msra.mxu0 %v423
        %1664 = vmatprep.subr.bf16.mxu0 %v428
        %1665 = vmatpush1.bf16.msra.mxu0 %v427
        %1666 = vmatprep.subr.bf16.mxu0 0
        %1667 = vmatpush1.bf16.msra.mxu0 0
        %1668 = vmatprep.subr.bf16.mxu0 0
        %1669 = vmatpush1.bf16.msra.mxu0 0
        %1670 = vmatprep.subr.bf16.mxu0 0
        %1671 = vmatpush1.bf16.msra.mxu0 0
        %1672 = vmatprep.subr.bf16.mxu0 0
        %1673 = vmatpush1.bf16.msra.mxu0 0
        %1674 = vmatprep.subr.bf16.mxu0 0
        %1675 = vmatpush1.bf16.msra.mxu0 0
        %1676 = vmatprep.subr.bf16.mxu0 0
        %1677 = vmatpush1.bf16.msra.mxu0 0
        %1678 = vmatprep.subr.bf16.mxu0 0
        %1679 = vmatpush1.bf16.msra.mxu0 0
        %1680 = vmatprep.subr.bf16.mxu0 0
        %1681 = vmatpush1.bf16.msra.mxu0 0
        %1682 = vmatprep.mubr.bf16.mxu0 0
        %1683 = vmatmul.mubr.bf16.gmra.mrb[0].mxu0 %v1648
        %v1684 = vpop.f32.mrb[0].mxu0
        %v1685 = vadd.f32 0.0, %v1684
        %v1686 = vpop.f32.mrb[0].mxu0
        %v1687 = vadd.f32 0.0, %v1686
        %v1688 = vpop.f32.mrb[0].mxu0
        %v1689 = vadd.f32 0.0, %v1688
        %v1690 = vpop.f32.mrb[0].mxu0
        %v1691 = vadd.f32 0.0, %v1690
        %1692 = vmatprep.mubr.bf16.mxu0 0
        %1693 = vmatmul.mubr.bf16.gmra.mrb[0].mxu0 %v1649
        %v1694 = vpop.f32.mrb[0].mxu0
        %v1695 = vpop.f32.mrb[0].mxu0
        %v1696 = vpop.f32.mrb[0].mxu0
        %v1697 = vpop.f32.mrb[0].mxu0
        %1698 = vdwg.mxu0
        %1699 = vmatprep.subr.bf16.mxu0 %v402
        %1700 = vmatpush1.bf16.msra.mxu0 %v401
        %1701 = vmatprep.subr.bf16.mxu0 %v406
        %1702 = vmatpush1.bf16.msra.mxu0 %v405
        %1703 = vmatprep.subr.bf16.mxu0 %v410
        %1704 = vmatpush1.bf16.msra.mxu0 %v409
        %1705 = vmatprep.subr.bf16.mxu0 %v414
        %1706 = vmatpush1.bf16.msra.mxu0 %v413
        %1707 = vmatprep.subr.bf16.mxu0 %v418
        %1708 = vmatpush1.bf16.msra.mxu0 %v417
        %1709 = vmatprep.subr.bf16.mxu0 %v422
        %1710 = vmatpush1.bf16.msra.mxu0 %v421
        %1711 = vmatprep.subr.bf16.mxu0 %v426
        %1712 = vmatpush1.bf16.msra.mxu0 %v425
        %1713 = vmatprep.subr.bf16.mxu0 %v430
        %1714 = vmatpush1.bf16.msra.mxu0 %v429
        %1715 = vmatprep.subr.bf16.mxu0 0
        %1716 = vmatpush1.bf16.msra.mxu0 0
        %1717 = vmatprep.subr.bf16.mxu0 0
        %1718 = vmatpush1.bf16.msra.mxu0 0
        %1719 = vmatprep.subr.bf16.mxu0 0
        %1720 = vmatpush1.bf16.msra.mxu0 0
        %1721 = vmatprep.subr.bf16.mxu0 0
        %1722 = vmatpush1.bf16.msra.mxu0 0
        %1723 = vmatprep.subr.bf16.mxu0 0
        %1724 = vmatpush1.bf16.msra.mxu0 0
        %1725 = vmatprep.subr.bf16.mxu0 0
        %1726 = vmatpush1.bf16.msra.mxu0 0
        %1727 = vmatprep.subr.bf16.mxu0 0
        %1728 = vmatpush1.bf16.msra.mxu0 0
        %1729 = vmatprep.subr.bf16.mxu0 0
        %1730 = vmatpush1.bf16.msra.mxu0 0
        %1731 = vmatprep.mubr.bf16.mxu0 0
        %1732 = vmatmul.mubr.bf16.gmra.mrb[0].mxu0 %v1648
        %v1733 = vpop.f32.mrb[0].mxu0
        %v1734 = vpop.f32.mrb[0].mxu0
        %v1735 = vpop.f32.mrb[0].mxu0
        %v1736 = vpop.f32.mrb[0].mxu0
        %1737 = vmatprep.mubr.bf16.mxu0 0
        %1738 = vmatmul.mubr.bf16.gmra.mrb[0].mxu0 %v1649
        %v1739 = vpop.f32.mrb[0].mxu0
        %v1740 = vadd.f32 0.0, %v1739
        %v1741 = vpop.f32.mrb[0].mxu0
        %v1742 = vadd.f32 0.0, %v1741
        %v1743 = vpop.f32.mrb[0].mxu0
        %v1744 = vadd.f32 0.0, %v1743
        %v1745 = vpop.f32.mrb[0].mxu0
        %v1746 = vadd.f32 0.0, %v1745
        %1747 = vdwg.mxu0
        %v1748 = vmul.f32 %v1687, %v1740
        %v1749 = vmul.f32 %v1691, %v1744
        %v1750 = vmul.f32 %v1742, %v1685
        %v1751 = vmul.f32 %v1746, %v1689
        %v1752 = vsub.f32 %v1748, %v1750
        %v1753 = vsub.f32 %v1749, %v1751
        %1754 = vadd.xlane.f32.xlu0 %v1752
        %v1755 = vpop.xlane.xlu0 %1754
        %1756 = vadd.xlane.f32.xlu0 %v1753
        %v1757 = vpop.xlane.xlu0 %1756
        %v1760 = vlaneseq
        %v1761 = vshrl.u32 %v1760, 7
        %v1762 = vsub.s32 %v574, %v1761
        %v1763 = vrot.slane %v1755, %v1762
        %v1764 = vlaneseq
        %v1765 = vshrl.u32 %v1764, 7
        %v1766 = vsub.s32 %v579, %v1765
        %v1767 = vrot.slane %v1757, %v1766
        %v1768 = vsel %vm584, %v1767, %v1763
        %1770 = vst.msk [vmem:[%s166 + $0x6] sm:$0x1] %vm587, %v1768
        %s1771 = scalar_lea.vmem %s172, 168
        %v1772 = vld [vmem:[%s1771] sm:$0xf]
        %v1773 = vld [vmem:[%s1771 + $0x4] sm:$0xf]
        %v1774 = vld [vmem:[%s1771 + $0x8] sm:$0xf]
        %v1775 = vld [vmem:[%s1771 + $0xc] sm:$0xf]
        %v1776 = vld [vmem:[%s1771 + $0x10] sm:$0xf]
        %v1777 = vld [vmem:[%s1771 + $0x14] sm:$0xf]
        %v1784 = vunpack.c.l.b16 %v1772
        %v1785 = vunpack.c.l.b16 %v1773
        %v1786 = vunpack.c.l.b16 %v1774
        %v1787 = vunpack.c.l.b16 %v1775
        %v1788 = vunpack.c.l.b16 %v1776
        %v1789 = vunpack.c.l.b16 %v1777
        %v1790 = vpack.c.b16 %v1785, %v1784
        %v1791 = vpack.c.b16 %v1787, %v1786
        %v1792 = vpack.c.b16 %v1789, %v1788
        %1796 = vmatprep.subr.bf16.mxu0 0
        %1797 = vmatpush1.bf16.msra.mxu0 %v1790
        %1798 = vmatprep.subr.bf16.mxu0 0
        %1799 = vmatpush1.bf16.msra.mxu0 %v1791
        %1800 = vmatprep.subr.bf16.mxu0 0
        %1801 = vmatpush1.bf16.msra.mxu0 %v1792
        %1802 = vmatprep.subr.bf16.mxu0 0
        %1803 = vmatpush1.bf16.msra.mxu0 0
        %1804 = vmatprep.subr.bf16.mxu0 0
        %1805 = vmatpush1.bf16.msra.mxu0 0
        %1806 = vmatprep.subr.bf16.mxu0 0
        %1807 = vmatpush1.bf16.msra.mxu0 0
        %1808 = vmatprep.subr.bf16.mxu0 0
        %1809 = vmatpush1.bf16.msra.mxu0 0
        %1810 = vmatprep.subr.bf16.mxu0 0
        %1811 = vmatpush1.bf16.msra.mxu0 0
        %1812 = vmatprep.subr.bf16.mxu0 0
        %1813 = vmatpush1.bf16.msra.mxu0 0
        %1814 = vmatprep.subr.bf16.mxu0 0
        %1815 = vmatpush1.bf16.msra.mxu0 0
        %1816 = vmatprep.subr.bf16.mxu0 0
        %1817 = vmatpush1.bf16.msra.mxu0 0
        %1818 = vmatprep.subr.bf16.mxu0 0
        %1819 = vmatpush1.bf16.msra.mxu0 0
        %1820 = vmatprep.subr.bf16.mxu0 0
        %1821 = vmatpush1.bf16.msra.mxu0 0
        %1822 = vmatprep.subr.bf16.mxu0 0
        %1823 = vmatpush1.bf16.msra.mxu0 0
        %1824 = vmatprep.subr.bf16.mxu0 0
        %1825 = vmatpush1.bf16.msra.mxu0 0
        %1826 = vmatprep.subr.bf16.mxu0 0
        %1827 = vmatpush1.bf16.msra.mxu0 0
        %1828 = vmatprep.mubr.bf16.mxu0 0
        %1829 = vmatmul.mubr.bf16.gmra.mrb[0].mxu0 %v247
        %v1830 = vpop.f32.mrb[0].mxu0
        %v1831 = vadd.f32 0.0, %v1830
        %v1832 = vpop.f32.mrb[0].mxu0
        %v1833 = vpop.f32.mrb[0].mxu0
        %v1834 = vadd.f32 0.0, %v1833
        %v1835 = vpop.f32.mrb[0].mxu0
        %1836 = vmatprep.mubr.bf16.mxu0 0
        %1837 = vmatmul.mubr.bf16.gmra.mrb[0].mxu0 %v250
        %v1838 = vpop.f32.mrb[0].mxu0
        %v1839 = vadd.f32 0.0, %v1838
        %v1840 = vpop.f32.mrb[0].mxu0
        %v1841 = vpop.f32.mrb[0].mxu0
        %v1842 = vadd.f32 0.0, %v1841
        %v1843 = vpop.f32.mrb[0].mxu0
        %1844 = vdwg.mxu0
        %v1845 = vpack.c.bf16 %v1834, %v1831
        %v1846 = vpack.c.bf16 %v1842, %v1839
        %1847 = vmatprep.subr.bf16.mxu0 %v400
        %1848 = vmatpush1.bf16.msra.mxu0 %v399
        %1849 = vmatprep.subr.bf16.mxu0 %v404
        %1850 = vmatpush1.bf16.msra.mxu0 %v403
        %1851 = vmatprep.subr.bf16.mxu0 %v408
        %1852 = vmatpush1.bf16.msra.mxu0 %v407
        %1853 = vmatprep.subr.bf16.mxu0 %v412
        %1854 = vmatpush1.bf16.msra.mxu0 %v411
        %1855 = vmatprep.subr.bf16.mxu0 %v416
        %1856 = vmatpush1.bf16.msra.mxu0 %v415
        %1857 = vmatprep.subr.bf16.mxu0 %v420
        %1858 = vmatpush1.bf16.msra.mxu0 %v419
        %1859 = vmatprep.subr.bf16.mxu0 %v424
        %1860 = vmatpush1.bf16.msra.mxu0 %v423
        %1861 = vmatprep.subr.bf16.mxu0 %v428
        %1862 = vmatpush1.bf16.msra.mxu0 %v427
        %1863 = vmatprep.subr.bf16.mxu0 0
        %1864 = vmatpush1.bf16.msra.mxu0 0
        %1865 = vmatprep.subr.bf16.mxu0 0
        %1866 = vmatpush1.bf16.msra.mxu0 0
        %1867 = vmatprep.subr.bf16.mxu0 0
        %1868 = vmatpush1.bf16.msra.mxu0 0
        %1869 = vmatprep.subr.bf16.mxu0 0
        %1870 = vmatpush1.bf16.msra.mxu0 0
        %1871 = vmatprep.subr.bf16.mxu0 0
        %1872 = vmatpush1.bf16.msra.mxu0 0
        %1873 = vmatprep.subr.bf16.mxu0 0
        %1874 = vmatpush1.bf16.msra.mxu0 0
        %1875 = vmatprep.subr.bf16.mxu0 0
        %1876 = vmatpush1.bf16.msra.mxu0 0
        %1877 = vmatprep.subr.bf16.mxu0 0
        %1878 = vmatpush1.bf16.msra.mxu0 0
        %1879 = vmatprep.mubr.bf16.mxu0 0
        %1880 = vmatmul.mubr.bf16.gmra.mrb[0].mxu0 %v1845
        %v1881 = vpop.f32.mrb[0].mxu0
        %v1882 = vadd.f32 0.0, %v1881
        %v1883 = vpop.f32.mrb[0].mxu0
        %v1884 = vadd.f32 0.0, %v1883
        %v1885 = vpop.f32.mrb[0].mxu0
        %v1886 = vadd.f32 0.0, %v1885
        %v1887 = vpop.f32.mrb[0].mxu0
        %v1888 = vadd.f32 0.0, %v1887
        %1889 = vmatprep.mubr.bf16.mxu0 0
        %1890 = vmatmul.mubr.bf16.gmra.mrb[0].mxu0 %v1846
        %v1891 = vpop.f32.mrb[0].mxu0
        %v1892 = vpop.f32.mrb[0].mxu0
        %v1893 = vpop.f32.mrb[0].mxu0
        %v1894 = vpop.f32.mrb[0].mxu0
        %1895 = vdwg.mxu0
        %1896 = vmatprep.subr.bf16.mxu0 %v402
        %1897 = vmatpush1.bf16.msra.mxu0 %v401
        %1898 = vmatprep.subr.bf16.mxu0 %v406
        %1899 = vmatpush1.bf16.msra.mxu0 %v405
        %1900 = vmatprep.subr.bf16.mxu0 %v410
        %1901 = vmatpush1.bf16.msra.mxu0 %v409
        %1902 = vmatprep.subr.bf16.mxu0 %v414
        %1903 = vmatpush1.bf16.msra.mxu0 %v413
        %1904 = vmatprep.subr.bf16.mxu0 %v418
        %1905 = vmatpush1.bf16.msra.mxu0 %v417
        %1906 = vmatprep.subr.bf16.mxu0 %v422
        %1907 = vmatpush1.bf16.msra.mxu0 %v421
        %1908 = vmatprep.subr.bf16.mxu0 %v426
        %1909 = vmatpush1.bf16.msra.mxu0 %v425
        %1910 = vmatprep.subr.bf16.mxu0 %v430
        %1911 = vmatpush1.bf16.msra.mxu0 %v429
        %1912 = vmatprep.subr.bf16.mxu0 0
        %1913 = vmatpush1.bf16.msra.mxu0 0
        %1914 = vmatprep.subr.bf16.mxu0 0
        %1915 = vmatpush1.bf16.msra.mxu0 0
        %1916 = vmatprep.subr.bf16.mxu0 0
        %1917 = vmatpush1.bf16.msra.mxu0 0
        %1918 = vmatprep.subr.bf16.mxu0 0
        %1919 = vmatpush1.bf16.msra.mxu0 0
        %1920 = vmatprep.subr.bf16.mxu0 0
        %1921 = vmatpush1.bf16.msra.mxu0 0
        %1922 = vmatprep.subr.bf16.mxu0 0
        %1923 = vmatpush1.bf16.msra.mxu0 0
        %1924 = vmatprep.subr.bf16.mxu0 0
        %1925 = vmatpush1.bf16.msra.mxu0 0
        %1926 = vmatprep.subr.bf16.mxu0 0
        %1927 = vmatpush1.bf16.msra.mxu0 0
        %1928 = vmatprep.mubr.bf16.mxu0 0
        %1929 = vmatmul.mubr.bf16.gmra.mrb[0].mxu0 %v1845
        %v1930 = vpop.f32.mrb[0].mxu0
        %v1931 = vpop.f32.mrb[0].mxu0
        %v1932 = vpop.f32.mrb[0].mxu0
        %v1933 = vpop.f32.mrb[0].mxu0
        %1934 = vmatprep.mubr.bf16.mxu0 0
        %1935 = vmatmul.mubr.bf16.gmra.mrb[0].mxu0 %v1846
        %v1936 = vpop.f32.mrb[0].mxu0
        %v1937 = vadd.f32 0.0, %v1936
        %v1938 = vpop.f32.mrb[0].mxu0
        %v1939 = vadd.f32 0.0, %v1938
        %v1940 = vpop.f32.mrb[0].mxu0
        %v1941 = vadd.f32 0.0, %v1940
        %v1942 = vpop.f32.mrb[0].mxu0
        %v1943 = vadd.f32 0.0, %v1942
        %1944 = vdwg.mxu0
        %v1945 = vmul.f32 %v1884, %v1937
        %v1946 = vmul.f32 %v1888, %v1941
        %v1947 = vmul.f32 %v1939, %v1882
        %v1948 = vmul.f32 %v1943, %v1886
        %v1949 = vsub.f32 %v1945, %v1947
        %v1950 = vsub.f32 %v1946, %v1948
        %1951 = vadd.xlane.f32.xlu0 %v1949
        %v1952 = vpop.xlane.xlu0 %1951
        %1953 = vadd.xlane.f32.xlu0 %v1950
        %v1954 = vpop.xlane.xlu0 %1953
        %v1957 = vlaneseq
        %v1958 = vshrl.u32 %v1957, 7
        %v1959 = vsub.s32 %v574, %v1958
        %v1960 = vrot.slane %v1952, %v1959
        %v1961 = vlaneseq
        %v1962 = vshrl.u32 %v1961, 7
        %v1963 = vsub.s32 %v579, %v1962
        %v1964 = vrot.slane %v1954, %v1963
        %v1965 = vsel %vm584, %v1964, %v1960
        %1967 = vst.msk [vmem:[%s166 + $0x7] sm:$0x1] %vm587, %v1965
        %s1968 = sand.u32 %s93, 1
        %s1969 = scalar_lea.sflag [#allocation3], %s1968
        %s1970 = sand.u32 %s93, 1
        %s1971 = smul.addr %s1970, 8
        %s1972 = scalar_lea.vmem [#allocation2], %s1971
        // Predicated region
        $region33: #{simple_model_forward.1} parent=31 // pred_check
          %p1973 = pneg %p103
        $region34: #{simple_model_forward.1} parent=31 // pred_check_branch
          %1975 = sbr.rel (%p1973) target = $region36
        $region35: #{simple_model_forward.1} parent=31 // pred_region
          %s1977 = ssub.s32 128, 128
          %1978 = vsyncadd %s1969, %s1977
          %s1979 = smul.addr %s17, 128
          %s1980 = scalar_lea.hbm %s3, %s1979
          %s1982 = sshll.u32 %s1972, 4
          %s1983 = int_to_ptr.vmem [resolvable:$true] %s1982
          %1985 = dma.vmem_to_hbm [thread:$0]  %s1983, 128, %s1980, %s1969
        $region36: #{simple_model_forward.1} parent=31 // pred_fallthru
          _
      $region32: #{simple_model_forward.1} parent=5 // pred_fallthru
        _
      %p1986 = scmp.le.s32.totalorder 2, %s12
      // Predicated region
      $region37: #{simple_model_forward.1} parent=5 // pred_check
        %p1987 = pneg %p1986
      $region38: #{simple_model_forward.1} parent=5 // pred_check_branch
        %1989 = sbr.rel (%p1987) target = $region40
      $region39: #{simple_model_forward.1} parent=5 // pred_region
        %s1990 = ssub.s32 %s12, 2
        // Predicated region
        $region41: #{simple_model_forward.1} parent=39 // pred_check
          %p1991 = pneg %p109
        $region42: #{simple_model_forward.1} parent=39 // pred_check_branch
          %1993 = sbr.rel (%p1991) target = $region44
        $region43: #{simple_model_forward.1} parent=39 // pred_region
          %s1994 = sand.u32 %s94, 1
          %s1995 = scalar_lea.sflag [#allocation3], %s1994
          %s1996 = sand.u32 %s94, 1
          %s1997 = smul.addr %s1996, 8
          %s1998 = scalar_lea.vmem [#allocation2], %s1997
          %1999 = dma.done %s1995, 128
        $region44: #{simple_model_forward.1} parent=39 // pred_fallthru
          _
      $region40: #{simple_model_forward.1} parent=5 // pred_fallthru
        _
    $region6: #{simple_model_forward.1} parent=1 // loop_footer
      %s16 = sadd.s32 1, %s12
    $region7: #{simple_model_forward.1} parent=1 // loop_footer_branch
      %11 = sbr.rel target = $region3
    $region8: #{simple_model_forward.1} parent=1 // loop_exit
      _
    %2000 = vsyncpa [#allocation3], 1
    %s2001 = scalar_lea.sflag [#allocation3], 1
    %2002 = vsyncpa %s2001, 1

</llo_original>
